<compile_context>
chip_gen: v6e
topology: v6e:2x2x1
jax: 0.10.0
libtpu: 0.0.40
codegen_flags: <defaults>
</compile_context>

<pallas_src>
import functools

import jax
import jax.numpy as jnp
from jax.experimental import pallas as pl
from jax.experimental.pallas import tpu as pltpu

K = 4        # ConvTranspose2d kernel size
STRIDE = 2
PAD = 1

# For output-row parity rh (identically for columns), only 2 of the 4 kernel
# taps contribute (the other 2 hit the zeros of the stride-2 dilated input).
# Entries are (kernel index k, offset into the 1-padded input):
#   parity 0 : oh = 2*ph     <- kh=3 @ xp[ph],   kh=1 @ xp[ph+1]
#   parity 1 : oh = 2*ph + 1 <- kh=2 @ xp[ph+1], kh=0 @ xp[ph+2]
_TAPS = (((3, 0), (1, 1)),
         ((2, 1), (0, 2)))


def snr_to_noise(snr_db):
    snr = 10.0 ** (snr_db / 10.0)
    return 1.0 / jnp.sqrt(2.0 * snr)


def _round_up(x, m):
    return (x + m - 1) // m * m


def _default_vmem_limit():
    # ~half of physical VMEM: 64 MiB on v5e/v6e (128 MiB), 32 MiB on v7x (64 MiB).
    try:
        cap = int(pltpu.get_tpu_info().vmem_capacity_bytes)
    except Exception:
        return 32 * 1024 * 1024
    return int(min(cap // 2, 100 * 1024 * 1024))


def _make_conv_kernel(wp, m_tile):
    """ConvTranspose2d (sub-pixel, tap-fused) + bias + PReLU + per-tile pooled sums."""

    def kernel(xt_ref, w_ref, b_ref, a_ref, mask_ref, y_ref, sums_ref):
        # xt_ref:   (1, 1, rows_in, Cin)   flattened padded-input rows (+ halo)
        # w_ref:    (9*Cin, OUT_LANES)     fused weight (zero blocks for unused taps)
        # b_ref/a_ref: (1, OUT_LANES)      bias / PReLU alpha, parity-tiled
        # mask_ref: (m_tile, 1)            1.0 for real pixels, 0.0 for junk columns
        # y_ref:    (1, 1, m_tile, OUT_LANES)  conv+PReLU output tile (compute dtype)
        # sums_ref: (1, 1, 1, OUT_LANES)       per-tile channel sums (f32)
        xt = xt_ref[0, 0]                                     # (rows_in, Cin)

        # The 9 tap windows are contiguous row-shifted slices of the flattened
        # padded image; concatenate along lanes -> single fused contraction dim.
        cols = []
        for hoff in range(3):
            for woff in range(3):
                off = hoff * wp + woff
                cols.append(xt[off:off + m_tile, :])          # (m_tile, Cin)
        patches = jnp.concatenate(cols, axis=-1)              # (m_tile, 9*Cin)

        acc = jnp.dot(patches, w_ref[...],
                      preferred_element_type=jnp.float32)     # (m_tile, OUT_LANES)
        acc = acc + b_ref[...]                                 # one broadcast add
        y = jnp.where(acc > 0, acc, a_ref[...] * acc)          # PReLU, one pass

        # Partial global-avg-pool numerator (junk columns masked out).
        sums_ref[0, 0] = jnp.sum(y * mask_ref[...], axis=0, keepdims=True)
        # Lane-dense (>=128 lanes) unmasked store of the tile.
        y_ref[0, 0] = y.astype(y_ref.dtype)

    return kernel


def _make_rescale_kernel(cout, out_lanes, inv_count):
    """AF module: pooled mean -> 1x1 conv -> ReLU -> 1x1 conv -> sigmoid -> rescale."""
    pad_lanes = out_lanes - 4 * cout

    def kernel(y_ref, psum_ref, noise_ref, w1n_ref, w1p_ref, b1_ref,
               w2_ref, b2_ref, o_ref):
        # Attention is recomputed per tile (tiny: two M=1 matmuls + sigmoid) so
        # both grid axes can stay "parallel" (no cross-iteration scratch state).
        s = psum_ref[0]                                        # (1, out_lanes)
        pooled = (s[:, 0:cout] + s[:, cout:2 * cout]
                  + s[:, 2 * cout:3 * cout]
                  + s[:, 3 * cout:4 * cout]) * inv_count       # (1, Cout) mean
        h = (noise_ref[...] * w1n_ref[...]
             + jnp.dot(pooled, w1p_ref[...], preferred_element_type=jnp.float32)
             + b1_ref[...])                                    # (1, C8)
        h = jnp.maximum(h, 0.0)
        att = jax.nn.sigmoid(jnp.dot(h, w2_ref[...],
                                     preferred_element_type=jnp.float32)
                             + b2_ref[...])                    # (1, Cout)
        parts = [att, att, att, att]                           # parity-tiled lanes
        if pad_lanes:
            parts.append(jnp.zeros((1, pad_lanes), jnp.float32))
        att_full = jnp.concatenate(parts, axis=-1)             # (1, out_lanes)

        o_ref[0, 0] = (y_ref[0, 0].astype(jnp.float32) * att_full).astype(o_ref.dtype)

    return kernel


@functools.partial(jax.jit, static_argnames=("compute_dtype", "tile_base_rows"))
def deconv_apply(x_nchw, snr_db, params, compute_dtype=jnp.bfloat16,
                 tile_base_rows=4):
    w_t = params["tconv_w"]        # (Cin, Cout, 4, 4)
    b_t = params["tconv_b"]        # (Cout,)
    alpha = params["prelu_a"]      # (Cout,)
    w1 = params["se1_w"]           # (C8, Cout+1, 1, 1)
    b1 = params["se1_b"]           # (C8,)
    w2 = params["se2_w"]           # (Cout, C8, 1, 1)
    b2 = params["se2_b"]           # (Cout,)

    N, Cin, H, W = x_nchw.shape
    Cout = w_t.shape[1]
    C8 = Cout // 8
    Wp = W + 2                                   # padded width (2 junk cols/row)
    out_lanes = max(128, _round_up(4 * Cout, 128))

    # --- HW tiling over base rows (each base row yields 2 output rows) ---------
    th = max(1, min(int(tile_base_rows), H))
    while H % th:
        th -= 1
    T = H // th
    m_tile = th * Wp                             # matmul M per tile (incl. junk cols)
    halo = 2 * Wp + 2                            # extra flattened rows a tile reads
    rows_in = m_tile + halo

    # --- padded input, flattened row-major over the padded width ---------------
    x = jnp.transpose(x_nchw, (0, 2, 3, 1)).astype(jnp.float32)     # NHWC
    xp = jnp.pad(x, ((0, 0), (1, 1), (1, 1), (0, 0)))               # (N, H+2, Wp, Cin)
    xflat = xp.reshape(N, (H + 2) * Wp, Cin)
    extra = (T - 1) * m_tile + rows_in - (H + 2) * Wp
    if extra > 0:                                                    # last-tile halo
        xflat = jnp.pad(xflat, ((0, 0), (0, extra), (0, 0)))
    # Per-tile windows with their 2-row halo baked in (tiny replication, ~2/TH).
    xtiles = jnp.stack([xflat[:, t * m_tile:t * m_tile + rows_in, :]
                        for t in range(T)], axis=1)                  # (N,T,rows_in,Cin)
    xtiles = xtiles.astype(compute_dtype)

    # --- fused, parity-interleaved, lane-padded weight --------------------------
    wf = jnp.zeros((9 * Cin, out_lanes), jnp.float32)
    for rh in range(2):
        for rw in range(2):
            p = rh * 2 + rw
            for kh, hoff in _TAPS[rh]:
                for kw, woff in _TAPS[rw]:
                    o = hoff * 3 + woff
                    wf = wf.at[o * Cin:(o + 1) * Cin,
                               p * Cout:(p + 1) * Cout].set(w_t[:, :, kh, kw])
    wf = wf.astype(compute_dtype)

    def lane_full(v):
        vv = jnp.tile(v.astype(jnp.float32), 4)                      # parity-tiled
        pad = out_lanes - 4 * Cout
        if pad:
            vv = jnp.concatenate([vv, jnp.zeros((pad,), jnp.float32)])
        return vv.reshape(1, out_lanes)

    b_full = lane_full(b_t)
    a_full = lane_full(alpha)
    mask = ((jnp.arange(m_tile) % Wp) < W).astype(jnp.float32).reshape(m_tile, 1)

    vmem_limit = _default_vmem_limit()
    in_item = jnp.dtype(compute_dtype).itemsize

    conv_cost = pl.CostEstimate(
        flops=2 * N * T * m_tile * (9 * Cin) * out_lanes,
        transcendentals=0,
        bytes_accessed=(N * T * rows_in * Cin * in_item
                        + 9 * Cin * out_lanes * in_item
                        + N * T * m_tile * out_lanes * in_item
                        + N * T * out_lanes * 4))

    # ---- pass 1: fused transposed-conv + PReLU + per-tile pooled sums ----------
    y_slab, tile_sums = pl.pallas_call(
        _make_conv_kernel(Wp, m_tile),
        out_shape=(jax.ShapeDtypeStruct((N, T, m_tile, out_lanes), compute_dtype),
                   jax.ShapeDtypeStruct((N, T, 1, out_lanes), jnp.float32)),
        grid=(N, T),
        in_specs=[
            pl.BlockSpec((1, 1, rows_in, Cin), lambda n, t: (n, t, 0, 0)),
            pl.BlockSpec((9 * Cin, out_lanes), lambda n, t: (0, 0)),
            pl.BlockSpec((1, out_lanes), lambda n, t: (0, 0)),
            pl.BlockSpec((1, out_lanes), lambda n, t: (0, 0)),
            pl.BlockSpec((m_tile, 1), lambda n, t: (0, 0)),
        ],
        out_specs=(pl.BlockSpec((1, 1, m_tile, out_lanes), lambda n, t: (n, t, 0, 0)),
                   pl.BlockSpec((1, 1, 1, out_lanes), lambda n, t: (n, t, 0, 0))),
        compiler_params=pltpu.CompilerParams(
            dimension_semantics=("parallel", "parallel"),
            vmem_limit_bytes=vmem_limit),
        cost_estimate=conv_cost,
    )(xtiles, wf, b_full, a_full, mask)

    # Cross-tile reduction of the pooled numerator (tiny, unavoidable sync point).
    pooled_sum = jnp.sum(tile_sums, axis=(1, 2)).reshape(N, 1, out_lanes)

    noise = jnp.full((1, 1), snr_to_noise(snr_db), jnp.float32)
    w1m = w1.reshape(C8, Cout + 1).T.astype(jnp.float32)   # (Cout+1, C8)
    w1n = w1m[0:1, :]                                      # noise row   (1, C8)
    w1p = w1m[1:, :]                                       # pooled rows (Cout, C8)
    b1m = b1.reshape(1, C8).astype(jnp.float32)
    w2m = w2.reshape(Cout, C8).T.astype(jnp.float32)       # (C8, Cout)
    b2m = b2.reshape(1, Cout).astype(jnp.float32)

    rescale_cost = pl.CostEstimate(
        flops=2 * N * T * m_tile * out_lanes,
        transcendentals=N * T * Cout,
        bytes_accessed=(N * T * m_tile * out_lanes * (in_item + 4)
                        + N * out_lanes * 4))

    # ---- pass 2: AF attention + channel rescale (single full-width multiply) ---
    out_slab = pl.pallas_call(
        _make_rescale_kernel(Cout, out_lanes, 1.0 / float(4 * H * W)),
        out_shape=jax.ShapeDtypeStruct((N, T, m_tile, out_lanes), jnp.float32),
        grid=(N, T),
        in_specs=[
            pl.BlockSpec((1, 1, m_tile, out_lanes), lambda n, t: (n, t, 0, 0)),
            pl.BlockSpec((1, 1, out_lanes), lambda n, t: (n, 0, 0)),
            pl.BlockSpec((1, 1), lambda n, t: (0, 0)),
            pl.BlockSpec((1, C8), lambda n, t: (0, 0)),
            pl.BlockSpec((Cout, C8), lambda n, t: (0, 0)),
            pl.BlockSpec((1, C8), lambda n, t: (0, 0)),
            pl.BlockSpec((C8, Cout), lambda n, t: (0, 0)),
            pl.BlockSpec((1, Cout), lambda n, t: (0, 0)),
        ],
        out_specs=pl.BlockSpec((1, 1, m_tile, out_lanes), lambda n, t: (n, t, 0, 0)),
        compiler_params=pltpu.CompilerParams(
            dimension_semantics=("parallel", "parallel"),
            vmem_limit_bytes=vmem_limit),
        cost_estimate=rescale_cost,
    )(y_slab, pooled_sum, noise, w1n, w1p, b1m, w2m, b2m)

    # Layout glue: drop junk columns/lanes, pixel-shuffle parities, back to NCHW.
    out = out_slab.reshape(N, H, Wp, out_lanes)[:, :, :W, :4 * Cout]
    out = (out.reshape(N, H, W, 2, 2, Cout)
           .transpose(0, 1, 3, 2, 4, 5)
           .reshape(N, STRIDE * H, STRIDE * W, Cout))
    return jnp.transpose(out, (0, 3, 1, 2))


def init_params(key, in_planes, out_planes):
    c8 = out_planes // 8
    ks = jax.random.split(key, 6)
    s_t = 1.0 / jnp.sqrt(in_planes * K * K)
    s_1 = 1.0 / jnp.sqrt(out_planes + 1.0)
    s_2 = 1.0 / jnp.sqrt(float(c8))
    u = lambda k, shape, s: jax.random.uniform(k, shape, jnp.float32, -s, s)
    return dict(
        tconv_w=u(ks[0], (in_planes, out_planes, K, K), s_t),
        tconv_b=u(ks[1], (out_planes,), s_t),
        prelu_a=jnp.full((out_planes,), 0.25, jnp.float32),
        se1_w=u(ks[2], (c8, out_planes + 1, 1, 1), s_1),
        se1_b=u(ks[3], (c8,), s_1),
        se2_w=u(ks[4], (out_planes, c8, 1, 1), s_2),
        se2_b=u(ks[5], (out_planes,), s_2),
    )


def reference(x_nchw, snr_db, params):
    """Pure-JAX reference mirroring the PyTorch forward."""
    w_t, b_t = params["tconv_w"], params["tconv_b"]
    alpha = params["prelu_a"]
    N, Cin, H, W = x_nchw.shape
    Cout = w_t.shape[1]
    C8 = Cout // 8
    # ConvTranspose2d via dilated conv with spatially-flipped kernel
    w_flip = jnp.transpose(w_t, (1, 0, 2, 3))[:, :, ::-1, ::-1]   # OIHW
    y = jax.lax.conv_general_dilated(
        x_nchw.astype(jnp.float32), w_flip, window_strides=(1, 1),
        padding=((K - 1 - PAD,) * 2, (K - 1 - PAD,) * 2),
        lhs_dilation=(STRIDE, STRIDE),
        dimension_numbers=("NCHW", "OIHW", "NCHW"))
    y = y + b_t[None, :, None, None]
    y = jnp.where(y > 0, y, alpha[None, :, None, None] * y)
    noise = snr_to_noise(snr_db)
    pooled = jnp.mean(y, axis=(2, 3))                              # (N, Cout)
    feat = jnp.concatenate([jnp.full((N, 1), noise, jnp.float32), pooled], axis=1)
    w1m = params["se1_w"].reshape(C8, Cout + 1).T
    w2m = params["se2_w"].reshape(Cout, C8).T
    h = jnp.maximum(feat @ w1m + params["se1_b"][None, :], 0.0)
    att = jax.nn.sigmoid(h @ w2m + params["se2_b"][None, :])
    return y * att[:, :, None, None]


if __name__ == "__main__":
    key = jax.random.PRNGKey(0)
    kx, kp = jax.random.split(key)

    N, Cin, H, W = 2, 8, 8, 8
    Cout = 16                      # out_planes (multiple of 8 for the AF module)

    x = jax.random.normal(kx, (N, Cin, H, W), jnp.float32)
    snr_db = jnp.float32(10.0)     # n_var passed to forward (SNR in dB)
    params = init_params(kp, Cin, Cout)

    ref = reference(x, snr_db, params)

    # f32 operands & f32 intermediate slab: tight check vs the pure-JAX reference.
    out_f32 = jax.block_until_ready(
        deconv_apply(x, snr_db, params, compute_dtype=jnp.float32))
    assert out_f32.shape == (N, Cout, STRIDE * H, STRIDE * W)
    assert jnp.allclose(out_f32, ref, atol=1e-4, rtol=1e-4), \
        float(jnp.max(jnp.abs(out_f32 - ref)))

    # bf16 matmul operands + bf16 intermediate slab (fast MXU / HBM path);
    # tolerance relaxed accordingly vs the pure-f32 reference.
    out_bf16 = jax.block_until_ready(
        deconv_apply(x, snr_db, params, compute_dtype=jnp.bfloat16))
    assert out_bf16.shape == (N, Cout, STRIDE * H, STRIDE * W)
    assert jnp.allclose(out_bf16, ref, atol=5e-2, rtol=5e-2), \
        float(jnp.max(jnp.abs(out_bf16 - ref)))

    print("KERNEL_OK")
</pallas_src>

<mosaic_0001>
module attributes {stable_mosaic.version = 11 : i64} {
  func.func @kernel(%arg0: i32, %arg1: i32, %arg2: memref<1x1x62x8xf32, #tpu.memory_space<vmem>>, %arg3: memref<72x128xf32, #tpu.memory_space<vmem>>, %arg4: memref<1x128xf32, #tpu.memory_space<vmem>>, %arg5: memref<1x128xf32, #tpu.memory_space<vmem>>, %arg6: memref<40x1xf32, #tpu.memory_space<vmem>>, %arg7: memref<1x1x40x128xf32, #tpu.memory_space<vmem>>, %arg8: memref<1x1x1x128xf32, #tpu.memory_space<vmem>>) attributes {dimension_semantics = [#tpu.dimension_semantics<parallel>, #tpu.dimension_semantics<parallel>], iteration_bounds = array<i64: 2, 2>, scalar_prefetch = 0 : i64, scratch_operands = 0 : i64, tpu.core_type = #tpu.core_type<tc>, window_params = [{transform_indices = @transform_0, window_bounds = array<i64: 1, 1, 62, 8>}, {pipeline_mode = #tpu.pipeline_mode<synchronous>, transform_indices = @transform_1, window_bounds = array<i64: 72, 128>}, {pipeline_mode = #tpu.pipeline_mode<synchronous>, transform_indices = @transform_2, window_bounds = array<i64: 1, 128>}, {pipeline_mode = #tpu.pipeline_mode<synchronous>, transform_indices = @transform_3, window_bounds = array<i64: 1, 128>}, {pipeline_mode = #tpu.pipeline_mode<synchronous>, transform_indices = @transform_4, window_bounds = array<i64: 40, 1>}, {transform_indices = @transform_5, window_bounds = array<i64: 1, 1, 40, 128>}, {transform_indices = @transform_6, window_bounds = array<i64: 1, 1, 1, 128>}]} {
    %c0 = arith.constant 0 : index
    %c0_0 = arith.constant 0 : index
    %c0_1 = arith.constant 0 : index
    %c0_2 = arith.constant 0 : index
    %0 = vector.load %arg2[%c0, %c0_0, %c0_1, %c0_2] : memref<1x1x62x8xf32, #tpu.memory_space<vmem>>, vector<1x1x62x8xf32>
    %1 = vector.shape_cast %0 : vector<1x1x62x8xf32> to vector<62x8xf32>
    %2 = vector.extract_strided_slice %1 {offsets = [0, 0], sizes = [40, 8], strides = [1, 1]} : vector<62x8xf32> to vector<40x8xf32>
    %3 = vector.extract_strided_slice %1 {offsets = [1, 0], sizes = [40, 8], strides = [1, 1]} : vector<62x8xf32> to vector<40x8xf32>
    %4 = vector.extract_strided_slice %1 {offsets = [2, 0], sizes = [40, 8], strides = [1, 1]} : vector<62x8xf32> to vector<40x8xf32>
    %5 = vector.extract_strided_slice %1 {offsets = [10, 0], sizes = [40, 8], strides = [1, 1]} : vector<62x8xf32> to vector<40x8xf32>
    %6 = vector.extract_strided_slice %1 {offsets = [11, 0], sizes = [40, 8], strides = [1, 1]} : vector<62x8xf32> to vector<40x8xf32>
    %7 = vector.extract_strided_slice %1 {offsets = [12, 0], sizes = [40, 8], strides = [1, 1]} : vector<62x8xf32> to vector<40x8xf32>
    %8 = vector.extract_strided_slice %1 {offsets = [20, 0], sizes = [40, 8], strides = [1, 1]} : vector<62x8xf32> to vector<40x8xf32>
    %9 = vector.extract_strided_slice %1 {offsets = [21, 0], sizes = [40, 8], strides = [1, 1]} : vector<62x8xf32> to vector<40x8xf32>
    %10 = vector.extract_strided_slice %1 {offsets = [22, 0], sizes = [40, 8], strides = [1, 1]} : vector<62x8xf32> to vector<40x8xf32>
    %11 = tpu.concatenate %2, %3, %4, %5, %6, %7, %8, %9, %10 in 1 : vector<40x8xf32>, vector<40x8xf32>, vector<40x8xf32>, vector<40x8xf32>, vector<40x8xf32>, vector<40x8xf32>, vector<40x8xf32>, vector<40x8xf32>, vector<40x8xf32> -> vector<40x72xf32>
    %c0_3 = arith.constant 0 : index
    %c0_4 = arith.constant 0 : index
    %12 = vector.load %arg3[%c0_3, %c0_4] : memref<72x128xf32, #tpu.memory_space<vmem>>, vector<72x128xf32>
    %cst = arith.constant dense<0.000000e+00> : vector<40x128xf32>
    %13 = tpu.matmul %11, %12, %cst {dimension_numbers = #tpu.dot_dimension_numbers<[1], [0], [0], [1], [0, 0, 1, 1], [], []>} : vector<40x72xf32>, vector<72x128xf32>, vector<40x128xf32> -> vector<40x128xf32>
    %c0_5 = arith.constant 0 : index
    %c0_6 = arith.constant 0 : index
    %14 = vector.load %arg4[%c0_5, %c0_6] : memref<1x128xf32, #tpu.memory_space<vmem>>, vector<1x128xf32>
    %15 = vector.broadcast %14 : vector<1x128xf32> to vector<40x128xf32>
    %16 = arith.addf %13, %15 : vector<40x128xf32>
    %cst_7 = arith.constant 0.000000e+00 : f32
    %17 = vector.broadcast %cst_7 : f32 to vector<40x128xf32>
    %18 = arith.cmpf ogt, %16, %17 : vector<40x128xf32>
    %c0_8 = arith.constant 0 : index
    %c0_9 = arith.constant 0 : index
    %19 = vector.load %arg5[%c0_8, %c0_9] : memref<1x128xf32, #tpu.memory_space<vmem>>, vector<1x128xf32>
    %20 = vector.broadcast %19 : vector<1x128xf32> to vector<40x128xf32>
    %21 = arith.mulf %20, %16 : vector<40x128xf32>
    %22 = arith.select %18, %16, %21 : vector<40x128xi1>, vector<40x128xf32>
    %c0_10 = arith.constant 0 : index
    %c0_11 = arith.constant 0 : index
    %23 = vector.load %arg6[%c0_10, %c0_11] : memref<40x1xf32, #tpu.memory_space<vmem>>, vector<40x1xf32>
    %24 = vector.broadcast %23 : vector<40x1xf32> to vector<40x128xf32>
    %25 = arith.mulf %22, %24 : vector<40x128xf32>
    %cst_12 = arith.constant dense<0.000000e+00> : vector<128xf32>
    %26 = vector.multi_reduction <add>, %25, %cst_12 [0] : vector<40x128xf32> to vector<128xf32>
    %27 = vector.shape_cast %26 : vector<128xf32> to vector<1x128xf32>
    %c0_13 = arith.constant 0 : index
    %c0_14 = arith.constant 0 : index
    %c0_15 = arith.constant 0 : index
    %c0_16 = arith.constant 0 : index
    %28 = vector.load %arg8[%c0_13, %c0_14, %c0_15, %c0_16] : memref<1x1x1x128xf32, #tpu.memory_space<vmem>>, vector<1x1x1x128xf32>
    %29 = vector.shape_cast %28 : vector<1x1x1x128xf32> to vector<1x128xf32>
    %30 = vector.shape_cast %27 : vector<1x128xf32> to vector<1x1x1x128xf32>
    tpu.vector_store %arg8[%c0_13, %c0_14, %c0_15, %c0_16], %30 {strides = array<i32>} : memref<1x1x1x128xf32, #tpu.memory_space<vmem>>, vector<1x1x1x128xf32>,
    %c0_17 = arith.constant 0 : index
    %c0_18 = arith.constant 0 : index
    %c0_19 = arith.constant 0 : index
    %c0_20 = arith.constant 0 : index
    %31 = vector.load %arg7[%c0_17, %c0_18, %c0_19, %c0_20] : memref<1x1x40x128xf32, #tpu.memory_space<vmem>>, vector<1x1x40x128xf32>
    %32 = vector.shape_cast %31 : vector<1x1x40x128xf32> to vector<40x128xf32>
    %33 = vector.shape_cast %22 : vector<40x128xf32> to vector<1x1x40x128xf32>
    tpu.vector_store %arg7[%c0_17, %c0_18, %c0_19, %c0_20], %33 {strides = array<i32>} : memref<1x1x40x128xf32, #tpu.memory_space<vmem>>, vector<1x1x40x128xf32>,
    return
  }
  func.func @transform_0(%arg0: i32, %arg1: i32) -> (i32, i32, i32, i32) {
    %c0_i32 = arith.constant 0 : i32
    %c0_i32_0 = arith.constant 0 : i32
    %c0_i32_1 = arith.constant 0 : i32
    return %arg0, %arg1, %c0_i32, %c0_i32_0 : i32, i32, i32, i32
  }
  func.func @transform_1(%arg0: i32, %arg1: i32) -> (i32, i32) {
    %c0_i32 = arith.constant 0 : i32
    %c0_i32_0 = arith.constant 0 : i32
    %c0_i32_1 = arith.constant 0 : i32
    return %c0_i32, %c0_i32_0 : i32, i32
  }
  func.func @transform_2(%arg0: i32, %arg1: i32) -> (i32, i32) {
    %c0_i32 = arith.constant 0 : i32
    %c0_i32_0 = arith.constant 0 : i32
    %c0_i32_1 = arith.constant 0 : i32
    return %c0_i32, %c0_i32_0 : i32, i32
  }
  func.func @transform_3(%arg0: i32, %arg1: i32) -> (i32, i32) {
    %c0_i32 = arith.constant 0 : i32
    %c0_i32_0 = arith.constant 0 : i32
    %c0_i32_1 = arith.constant 0 : i32
    return %c0_i32, %c0_i32_0 : i32, i32
  }
  func.func @transform_4(%arg0: i32, %arg1: i32) -> (i32, i32) {
    %c0_i32 = arith.constant 0 : i32
    %c0_i32_0 = arith.constant 0 : i32
    %c0_i32_1 = arith.constant 0 : i32
    return %c0_i32, %c0_i32_0 : i32, i32
  }
  func.func @transform_5(%arg0: i32, %arg1: i32) -> (i32, i32, i32, i32) {
    %c0_i32 = arith.constant 0 : i32
    %c0_i32_0 = arith.constant 0 : i32
    %c0_i32_1 = arith.constant 0 : i32
    return %arg0, %arg1, %c0_i32, %c0_i32_0 : i32, i32, i32, i32
  }
  func.func @transform_6(%arg0: i32, %arg1: i32) -> (i32, i32, i32, i32) {
    %c0_i32 = arith.constant 0 : i32
    %c0_i32_0 = arith.constant 0 : i32
    %c0_i32_1 = arith.constant 0 : i32
    return %arg0, %arg1, %c0_i32, %c0_i32_0 : i32, i32, i32, i32
  }
}

module attributes {stable_mosaic.version = 11 : i64} {
  func.func @kernel(%arg0: i32, %arg1: i32, %arg2: memref<1x1x40x128xf32, #tpu.memory_space<vmem>>, %arg3: memref<1x1x128xf32, #tpu.memory_space<vmem>>, %arg4: memref<1x1xf32, #tpu.memory_space<vmem>>, %arg5: memref<1x2xf32, #tpu.memory_space<vmem>>, %arg6: memref<16x2xf32, #tpu.memory_space<vmem>>, %arg7: memref<1x2xf32, #tpu.memory_space<vmem>>, %arg8: memref<2x16xf32, #tpu.memory_space<vmem>>, %arg9: memref<1x16xf32, #tpu.memory_space<vmem>>, %arg10: memref<1x1x40x128xf32, #tpu.memory_space<vmem>>) attributes {dimension_semantics = [#tpu.dimension_semantics<parallel>, #tpu.dimension_semantics<parallel>], iteration_bounds = array<i64: 2, 2>, scalar_prefetch = 0 : i64, scratch_operands = 0 : i64, tpu.core_type = #tpu.core_type<tc>, window_params = [{transform_indices = @transform_0, window_bounds = array<i64: 1, 1, 40, 128>}, {transform_indices = @transform_1, window_bounds = array<i64: 1, 1, 128>}, {pipeline_mode = #tpu.pipeline_mode<synchronous>, transform_indices = @transform_2, window_bounds = array<i64: 1, 1>}, {pipeline_mode = #tpu.pipeline_mode<synchronous>, transform_indices = @transform_3, window_bounds = array<i64: 1, 2>}, {pipeline_mode = #tpu.pipeline_mode<synchronous>, transform_indices = @transform_4, window_bounds = array<i64: 16, 2>}, {pipeline_mode = #tpu.pipeline_mode<synchronous>, transform_indices = @transform_5, window_bounds = array<i64: 1, 2>}, {pipeline_mode = #tpu.pipeline_mode<synchronous>, transform_indices = @transform_6, window_bounds = array<i64: 2, 16>}, {pipeline_mode = #tpu.pipeline_mode<synchronous>, transform_indices = @transform_7, window_bounds = array<i64: 1, 16>}, {transform_indices = @transform_8, window_bounds = array<i64: 1, 1, 40, 128>}]} {
    %c0 = arith.constant 0 : index
    %c0_0 = arith.constant 0 : index
    %c0_1 = arith.constant 0 : index
    %0 = vector.load %arg3[%c0, %c0_0, %c0_1] : memref<1x1x128xf32, #tpu.memory_space<vmem>>, vector<1x1x128xf32>
    %1 = vector.shape_cast %0 : vector<1x1x128xf32> to vector<1x128xf32>
    %2 = vector.extract_strided_slice %1 {offsets = [0, 0], sizes = [1, 16], strides = [1, 1]} : vector<1x128xf32> to vector<1x16xf32>
    %3 = vector.extract_strided_slice %1 {offsets = [0, 16], sizes = [1, 16], strides = [1, 1]} : vector<1x128xf32> to vector<1x16xf32>
    %4 = arith.addf %2, %3 : vector<1x16xf32>
    %5 = vector.extract_strided_slice %1 {offsets = [0, 32], sizes = [1, 16], strides = [1, 1]} : vector<1x128xf32> to vector<1x16xf32>
    %6 = arith.addf %4, %5 : vector<1x16xf32>
    %7 = vector.extract_strided_slice %1 {offsets = [0, 48], sizes = [1, 16], strides = [1, 1]} : vector<1x128xf32> to vector<1x16xf32>
    %8 = arith.addf %6, %7 : vector<1x16xf32>
    %cst = arith.constant 3.906250e-03 : f32
    %9 = vector.broadcast %cst : f32 to vector<1x16xf32>
    %10 = arith.mulf %8, %9 : vector<1x16xf32>
    %c0_2 = arith.constant 0 : index
    %c0_3 = arith.constant 0 : index
    %11 = vector.load %arg4[%c0_2, %c0_3] : memref<1x1xf32, #tpu.memory_space<vmem>>, vector<1x1xf32>
    %c0_4 = arith.constant 0 : index
    %c0_5 = arith.constant 0 : index
    %12 = vector.load %arg5[%c0_4, %c0_5] : memref<1x2xf32, #tpu.memory_space<vmem>>, vector<1x2xf32>
    %13 = vector.broadcast %11 : vector<1x1xf32> to vector<1x2xf32>
    %14 = arith.mulf %13, %12 : vector<1x2xf32>
    %c0_6 = arith.constant 0 : index
    %c0_7 = arith.constant 0 : index
    %15 = vector.load %arg6[%c0_6, %c0_7] : memref<16x2xf32, #tpu.memory_space<vmem>>, vector<16x2xf32>
    %cst_8 = arith.constant dense<0.000000e+00> : vector<1x2xf32>
    %16 = tpu.matmul %10, %15, %cst_8 {dimension_numbers = #tpu.dot_dimension_numbers<[1], [0], [0], [1], [0, 0, 1, 1], [], []>} : vector<1x16xf32>, vector<16x2xf32>, vector<1x2xf32> -> vector<1x2xf32>
    %17 = arith.addf %14, %16 : vector<1x2xf32>
    %c0_9 = arith.constant 0 : index
    %c0_10 = arith.constant 0 : index
    %18 = vector.load %arg7[%c0_9, %c0_10] : memref<1x2xf32, #tpu.memory_space<vmem>>, vector<1x2xf32>
    %19 = arith.addf %17, %18 : vector<1x2xf32>
    %cst_11 = arith.constant 0.000000e+00 : f32
    %20 = vector.broadcast %cst_11 : f32 to vector<1x2xf32>
    %21 = arith.maximumf %19, %20 : vector<1x2xf32>
    %c0_12 = arith.constant 0 : index
    %c0_13 = arith.constant 0 : index
    %22 = vector.load %arg8[%c0_12, %c0_13] : memref<2x16xf32, #tpu.memory_space<vmem>>, vector<2x16xf32>
    %cst_14 = arith.constant dense<0.000000e+00> : vector<1x16xf32>
    %23 = tpu.matmul %21, %22, %cst_14 {dimension_numbers = #tpu.dot_dimension_numbers<[1], [0], [0], [1], [0, 0, 1, 1], [], []>} : vector<1x2xf32>, vector<2x16xf32>, vector<1x16xf32> -> vector<1x16xf32>
    %c0_15 = arith.constant 0 : index
    %c0_16 = arith.constant 0 : index
    %24 = vector.load %arg9[%c0_15, %c0_16] : memref<1x16xf32, #tpu.memory_space<vmem>>, vector<1x16xf32>
    %25 = arith.addf %23, %24 : vector<1x16xf32>
    %26 = arith.negf %25 : vector<1x16xf32>
    %27 = math.exp %26 : vector<1x16xf32>
    %cst_17 = arith.constant 1.000000e+00 : f32
    %28 = vector.broadcast %cst_17 : f32 to vector<1x16xf32>
    %29 = arith.addf %28, %27 : vector<1x16xf32>
    %30 = arith.divf %28, %29 : vector<1x16xf32>
    %cst_18 = arith.constant 0.000000e+00 : f32
    %31 = vector.broadcast %cst_18 : f32 to vector<1x64xf32>
    %32 = tpu.concatenate %30, %30, %30, %30, %31 in 1 : vector<1x16xf32>, vector<1x16xf32>, vector<1x16xf32>, vector<1x16xf32>, vector<1x64xf32> -> vector<1x128xf32>
    %c0_19 = arith.constant 0 : index
    %c0_20 = arith.constant 0 : index
    %c0_21 = arith.constant 0 : index
    %c0_22 = arith.constant 0 : index
    %33 = vector.load %arg2[%c0_19, %c0_20, %c0_21, %c0_22] : memref<1x1x40x128xf32, #tpu.memory_space<vmem>>, vector<1x1x40x128xf32>
    %34 = vector.shape_cast %33 : vector<1x1x40x128xf32> to vector<40x128xf32>
    %35 = vector.broadcast %32 : vector<1x128xf32> to vector<40x128xf32>
    %36 = arith.mulf %34, %35 : vector<40x128xf32>
    %c0_23 = arith.constant 0 : index
    %c0_24 = arith.constant 0 : index
    %c0_25 = arith.constant 0 : index
    %c0_26 = arith.constant 0 : index
    %37 = vector.load %arg10[%c0_23, %c0_24, %c0_25, %c0_26] : memref<1x1x40x128xf32, #tpu.memory_space<vmem>>, vector<1x1x40x128xf32>
    %38 = vector.shape_cast %37 : vector<1x1x40x128xf32> to vector<40x128xf32>
    %39 = vector.shape_cast %36 : vector<40x128xf32> to vector<1x1x40x128xf32>
    tpu.vector_store %arg10[%c0_23, %c0_24, %c0_25, %c0_26], %39 {strides = array<i32>} : memref<1x1x40x128xf32, #tpu.memory_space<vmem>>, vector<1x1x40x128xf32>,
    return
  }
  func.func @transform_0(%arg0: i32, %arg1: i32) -> (i32, i32, i32, i32) {
    %c0_i32 = arith.constant 0 : i32
    %c0_i32_0 = arith.constant 0 : i32
    %c0_i32_1 = arith.constant 0 : i32
    return %arg0, %arg1, %c0_i32, %c0_i32_0 : i32, i32, i32, i32
  }
  func.func @transform_1(%arg0: i32, %arg1: i32) -> (i32, i32, i32) {
    %c0_i32 = arith.constant 0 : i32
    %c0_i32_0 = arith.constant 0 : i32
    %c0_i32_1 = arith.constant 0 : i32
    return %arg0, %c0_i32, %c0_i32_0 : i32, i32, i32
  }
  func.func @transform_2(%arg0: i32, %arg1: i32) -> (i32, i32) {
    %c0_i32 = arith.constant 0 : i32
    %c0_i32_0 = arith.constant 0 : i32
    %c0_i32_1 = arith.constant 0 : i32
    return %c0_i32, %c0_i32_0 : i32, i32
  }
  func.func @transform_3(%arg0: i32, %arg1: i32) -> (i32, i32) {
    %c0_i32 = arith.constant 0 : i32
    %c0_i32_0 = arith.constant 0 : i32
    %c0_i32_1 = arith.constant 0 : i32
    return %c0_i32, %c0_i32_0 : i32, i32
  }
  func.func @transform_4(%arg0: i32, %arg1: i32) -> (i32, i32) {
    %c0_i32 = arith.constant 0 : i32
    %c0_i32_0 = arith.constant 0 : i32
    %c0_i32_1 = arith.constant 0 : i32
    return %c0_i32, %c0_i32_0 : i32, i32
  }
  func.func @transform_5(%arg0: i32, %arg1: i32) -> (i32, i32) {
    %c0_i32 = arith.constant 0 : i32
    %c0_i32_0 = arith.constant 0 : i32
    %c0_i32_1 = arith.constant 0 : i32
    return %c0_i32, %c0_i32_0 : i32, i32
  }
  func.func @transform_6(%arg0: i32, %arg1: i32) -> (i32, i32) {
    %c0_i32 = arith.constant 0 : i32
    %c0_i32_0 = arith.constant 0 : i32
    %c0_i32_1 = arith.constant 0 : i32
    return %c0_i32, %c0_i32_0 : i32, i32
  }
  func.func @transform_7(%arg0: i32, %arg1: i32) -> (i32, i32) {
    %c0_i32 = arith.constant 0 : i32
    %c0_i32_0 = arith.constant 0 : i32
    %c0_i32_1 = arith.constant 0 : i32
    return %c0_i32, %c0_i32_0 : i32, i32
  }
  func.func @transform_8(%arg0: i32, %arg1: i32) -> (i32, i32, i32, i32) {
    %c0_i32 = arith.constant 0 : i32
    %c0_i32_0 = arith.constant 0 : i32
    %c0_i32_1 = arith.constant 0 : i32
    return %arg0, %arg1, %c0_i32, %c0_i32_0 : i32, i32, i32, i32
  }
}

</mosaic_0001>

<llo_original>
// kernel: tile.19
$region0: #{tile.19}
  %s0 = inlined_call_operand.vmem [shape: f32[4,16], index: 0, kind: input, shape index: {}]
  %s1 = inlined_call_operand.vmem [shape: f32[64], index: 1, kind: output, shape index: {}]
  $region1: #{tile.19} parent=0
    #allocation0 [shape = 'u8[4096]{0}', space=vmem, size = 0x1000, scoped, tag = 'scoped mem for output reshape']
    #allocation1 [shape = 'u8[4096]{0}', space=vmem, size = 0x1000, scoped, tag = 'scoped mem for input reshape']
    %s3 = sshll.u32 1, 4
    %s4 = ssub.s32 %s3, 1
    %v5 = vld [vmem:[%s0] sm:%s4]
    %6 = vst [vmem:[#allocation1] sm:%s4] %v5
    %v7 = vld [vmem:[#allocation1] sm:$0x1]
    %vm8 = vcmask 130048
    %9 = vst.msk [vmem:[#allocation0] sm:$0x1] %vm8, %v7
    %s10 = scalar_lea.vmem [#allocation1], 3
    %v11 = vld [vmem:[%s10] sm:$0x1]
    %12 = vrot.lane.b32.xlu0 %v11, 48
    %v13 = vpop.permute.xlu0 %12
    %vm14 = vcmask 523648
    %15 = vst.msk [vmem:[#allocation0] sm:$0x1] %vm14, %v13
    %s16 = scalar_lea.vmem [#allocation1], 2
    %v17 = vld [vmem:[%s16] sm:$0x1]
    %18 = vrot.lane.b32.xlu0 %v17, 32
    %v19 = vpop.permute.xlu0 %18
    %vm20 = vcmask 392448
    %21 = vst.msk [vmem:[#allocation0] sm:$0x1] %vm20, %v19
    %s22 = scalar_lea.vmem [#allocation1], 1
    %v23 = vld [vmem:[%s22] sm:$0x1]
    %24 = vrot.lane.b32.xlu0 %v23, 16
    %v25 = vpop.permute.xlu0 %24
    %vm26 = vcmask 261248
    %27 = vst.msk [vmem:[#allocation0] sm:$0x1] %vm26, %v25
    %s29 = sshll.u32 1, 1
    %s30 = ssub.s32 %s29, 1
    %v32 = vld [vmem:[#allocation0] sm:%s30]
    %s33 = sshll.u32 1, 1
    %s34 = ssub.s32 %s33, 1
    %35 = vst [vmem:[%s1] sm:%s34] %v32

// kernel: tile.18
$region0: #{tile.18}
  #allocation2 [shape = 's32[1]{0}', space=sflag, size = 0x4, scoped, tag = 'scoped memory for tile.18']
  %s0 = inlined_call_operand.hbm [shape: f32[16], index: 0, kind: input, shape index: {}]
  %s1 = inlined_call_operand.vmem [shape: f32[4,16], index: 1, kind: output, shape index: {}]
  $region1: #{tile.18} parent=0
    #allocation0 [shape = 'u8[512]{0}', space=vmem, size = 0x400, scoped, tag = 'operand span for operand 0']
    #allocation1 [shape = 's32[1]{0}', space=sflag, size = 0x4, scoped, tag = 'scoped memory for tile.18']
    %2 = vsyncpa [#allocation1], 0
    // Predicated region
    $region2: #{tile.18} parent=1 // pred_check
      _
    $region3: #{tile.18} parent=1 // pred_check_branch
      %4 = sbr.rel (0) target = $region5
    $region4: #{tile.18} parent=1 // pred_region
      %s6 = ssub.s32 16, 16
      %7 = vsyncadd [#allocation1], %s6
      %s9 = sshll.u32 [#allocation0], 4
      %s10 = int_to_ptr.vmem [resolvable:$true] %s9
      %12 = dma.hbm_to_vmem [thread:$0]  %s0, 16, %s10, [#allocation1]
    $region5: #{tile.18} parent=1 // pred_fallthru
      _
    // Predicated region
    $region6: #{tile.18} parent=1 // pred_check
      _
    $region7: #{tile.18} parent=1 // pred_check_branch
      %14 = sbr.rel (0) target = $region9
    $region8: #{tile.18} parent=1 // pred_region
      %15 = dma.done [#allocation1], 16
    $region9: #{tile.18} parent=1 // pred_fallthru
      _
    %v16 = vld [vmem:[#allocation0] ss:$0 sm:$0xff]
    %17 = vst [vmem:[%s1] sm:$0xf] %v16
    %18 = vsyncpa [#allocation1], 1

// kernel: deconv_apply.3
$region0: #{deconv_apply.3}
  #allocation0 [shape = 'u32[]', space=smem, size = 0x4, offset = 0x4, fixed_abs, tag = 'smem constant byte address 0x4 - core index']
  #allocation1 [shape = 'u32[144,128]{1,0:T(1,128)}', space=vmem, size = 0x12000, scoped, tag = 'internal scratch']
  #allocation2 [shape = 'f32[1,1]{1,0:T(1,128)S(1)}', space=vmem, size = 0x200, scoped, tag = 'scoped memory for deconv_apply.3']
  %s0 = inlined_call_operand.vmem [shape: f32[2,2,40,128], index: 0, kind: input, shape index: {}]
  %s1 = inlined_call_operand.vmem [shape: f32[2,1,128], index: 1, kind: input, shape index: {}]
  %s2 = inlined_call_operand.<no memory space> [shape: f32[1,1], index: 2, kind: input, shape index: {}]
  %s3 = inlined_call_operand.vmem [shape: f32[1,2], index: 3, kind: input, shape index: {}]
  %s4 = inlined_call_operand.vmem [shape: f32[16,2], index: 4, kind: input, shape index: {}]
  %s5 = inlined_call_operand.vmem [shape: f32[1,2], index: 5, kind: input, shape index: {}]
  %s6 = inlined_call_operand.vmem [shape: f32[2,16], index: 6, kind: input, shape index: {}]
  %s7 = inlined_call_operand.vmem [shape: f32[1,16], index: 7, kind: input, shape index: {}]
  %s8 = inlined_call_operand.vmem [shape: f32[2,2,40,128], index: 8, kind: output, shape index: {}]
  %s9 = sld [smem:[#allocation0]]
  $region65: #{deconv_apply.3} parent=0
    _
  %s11 = ssub.s32 1, %s9
  %s12 = scalar_select 0, %s11, %s9
  %v13 = vstv %s2
  %14 = vst [vmem:[#allocation2] sm:$0x1] %v13
  loop: start=0, step=1, limit=6
  $region2: #{deconv_apply.3} parent=0 // loop_pre_header
    _
  $region3: #{deconv_apply.3} parent=0 // loop_header
    %s16 = sphi 0, %s20
    %p17 = scmp.ge.s32.totalorder %s16, 6
    %s23 = sphi 0, %s35
    %s24 = sphi 0, %s31
    %s25 = sphi 0, %s23
    %s26 = sphi 0, %s24
    %s27 = sphi 0, %s25
    %s28 = sphi 0, %s26
    %s40 = sphi 0, %s42
    %s43 = sphi 0, %s40
    %s44 = sphi 0, %s43
    %s60 = sphi 0, %s44
    %s66 = sphi 0, %s68
    %s69 = sphi 0, %s66
    %s70 = sphi 0, %s69
    %s86 = sphi 0, %s70
    %s90 = sphi 0, %s90
    %s92 = sphi 0, %s90
    %s93 = sphi 0, %s92
    %s107 = sphi 0, %s93
    %s111 = sphi 0, %s111
    %s113 = sphi 0, %s111
    %s114 = sphi 0, %s113
    %s128 = sphi 0, %s114
    %s132 = sphi 0, %s132
    %s134 = sphi 0, %s132
    %s135 = sphi 0, %s134
    %s149 = sphi 0, %s135
    %s153 = sphi 0, %s153
    %s155 = sphi 0, %s153
    %s156 = sphi 0, %s155
    %s170 = sphi 0, %s156
    %s174 = sphi 0, %s174
    %s176 = sphi 0, %s174
    %s177 = sphi 0, %s176
    %s191 = sphi 0, %s177
    %s195 = sphi 0, %s195
    %s197 = sphi 0, %s195
    %s198 = sphi 0, %s197
    %s212 = sphi 0, %s198
    %s220 = sphi 0, %s222
    %s223 = sphi 0, %s220
    %s224 = sphi 0, %s223
    %s240 = sphi 0, %s224
  $region4: #{deconv_apply.3} parent=0 // loop_header_branch
    %19 = sbr.rel (%p17) target = $region8
  $region5: #{deconv_apply.3} parent=0 // loop_body
    %s21 = ssub.s32 %s16, 1
    %s22 = ssub.s32 %s16, 2
    %s29 = sadd.s32 1, %s24
    %p30 = scmp.ge.s32.totalorder %s29, 2
    %s31 = scalar_select %p30, 0, %s29
    %s32 = sadd.s32 1, %s23
    %s33 = scalar_select %p30, %s32, %s23
    %p34 = scmp.ge.s32.totalorder %s33, 2
    %s35 = scalar_select %p34, 0, %s33
    %s36 = ssub.s32 %s23, %s35
    %s37 = ssub.s32 %s24, %s31
    %s38 = sor.u32 %s36, %s37
    %p39 = scmp.eq.s32.totalorder %s38, 0
    %s41 = sadd.s32 %s40, 1
    %s42 = scalar_select %p39, %s40, %s41
    %p45 = pneg %p39
    %p46 = scmp.eq.s32.totalorder %s16, 3
    %p47 = por %p45, %p46
    %p48 = scmp.ne.s32.totalorder %s40, %s43
    %p49 = scmp.eq.s32.totalorder %s16, 0
    %p50 = por %p48, %p49
    %p51 = scmp.ne.s32.totalorder %s40, %s43
    %p52 = scmp.eq.s32.totalorder %s21, 3
    %p53 = por %p51, %p52
    %p54 = scmp.ne.s32.totalorder %s43, %s44
    %p55 = scmp.eq.s32.totalorder %s21, 0
    %p56 = por %p54, %p55
    %p57 = scmp.ne.s32.totalorder %s43, %s44
    %p58 = scmp.eq.s32.totalorder %s22, 3
    %p59 = por %p57, %p58
    %p61 = scmp.ne.s32.totalorder %s44, %s60
    %p62 = scmp.eq.s32.totalorder %s22, 0
    %p63 = por %p61, %p62
    %s64 = ssub.s32 %s23, %s35
    %p65 = scmp.eq.s32.totalorder %s64, 0
    %s67 = sadd.s32 %s66, 1
    %s68 = scalar_select %p65, %s66, %s67
    %p71 = pneg %p65
    %p72 = scmp.eq.s32.totalorder %s16, 3
    %p73 = por %p71, %p72
    %p74 = scmp.ne.s32.totalorder %s66, %s69
    %p75 = scmp.eq.s32.totalorder %s16, 0
    %p76 = por %p74, %p75
    %p77 = scmp.ne.s32.totalorder %s66, %s69
    %p78 = scmp.eq.s32.totalorder %s21, 3
    %p79 = por %p77, %p78
    %p80 = scmp.ne.s32.totalorder %s69, %s70
    %p81 = scmp.eq.s32.totalorder %s21, 0
    %p82 = por %p80, %p81
    %p83 = scmp.ne.s32.totalorder %s69, %s70
    %p84 = scmp.eq.s32.totalorder %s22, 3
    %p85 = por %p83, %p84
    %p87 = scmp.ne.s32.totalorder %s70, %s86
    %p88 = scmp.eq.s32.totalorder %s22, 0
    %p89 = por %p87, %p88
    %s91 = sadd.s32 %s90, 1
    %p94 = scmp.eq.s32.totalorder %s16, 3
    %p95 = scmp.ne.s32.totalorder %s90, %s92
    %p96 = scmp.eq.s32.totalorder %s16, 0
    %p97 = por %p95, %p96
    %p98 = scmp.ne.s32.totalorder %s90, %s92
    %p99 = scmp.eq.s32.totalorder %s21, 3
    %p100 = por %p98, %p99
    %p101 = scmp.ne.s32.totalorder %s92, %s93
    %p102 = scmp.eq.s32.totalorder %s21, 0
    %p103 = por %p101, %p102
    %p104 = scmp.ne.s32.totalorder %s92, %s93
    %p105 = scmp.eq.s32.totalorder %s22, 3
    %p106 = por %p104, %p105
    %p108 = scmp.ne.s32.totalorder %s93, %s107
    %p109 = scmp.eq.s32.totalorder %s22, 0
    %p110 = por %p108, %p109
    %s112 = sadd.s32 %s111, 1
    %p115 = scmp.eq.s32.totalorder %s16, 3
    %p116 = scmp.ne.s32.totalorder %s111, %s113
    %p117 = scmp.eq.s32.totalorder %s16, 0
    %p118 = por %p116, %p117
    %p119 = scmp.ne.s32.totalorder %s111, %s113
    %p120 = scmp.eq.s32.totalorder %s21, 3
    %p121 = por %p119, %p120
    %p122 = scmp.ne.s32.totalorder %s113, %s114
    %p123 = scmp.eq.s32.totalorder %s21, 0
    %p124 = por %p122, %p123
    %p125 = scmp.ne.s32.totalorder %s113, %s114
    %p126 = scmp.eq.s32.totalorder %s22, 3
    %p127 = por %p125, %p126
    %p129 = scmp.ne.s32.totalorder %s114, %s128
    %p130 = scmp.eq.s32.totalorder %s22, 0
    %p131 = por %p129, %p130
    %s133 = sadd.s32 %s132, 1
    %p136 = scmp.eq.s32.totalorder %s16, 3
    %p137 = scmp.ne.s32.totalorder %s132, %s134
    %p138 = scmp.eq.s32.totalorder %s16, 0
    %p139 = por %p137, %p138
    %p140 = scmp.ne.s32.totalorder %s132, %s134
    %p141 = scmp.eq.s32.totalorder %s21, 3
    %p142 = por %p140, %p141
    %p143 = scmp.ne.s32.totalorder %s134, %s135
    %p144 = scmp.eq.s32.totalorder %s21, 0
    %p145 = por %p143, %p144
    %p146 = scmp.ne.s32.totalorder %s134, %s135
    %p147 = scmp.eq.s32.totalorder %s22, 3
    %p148 = por %p146, %p147
    %p150 = scmp.ne.s32.totalorder %s135, %s149
    %p151 = scmp.eq.s32.totalorder %s22, 0
    %p152 = por %p150, %p151
    %s154 = sadd.s32 %s153, 1
    %p157 = scmp.eq.s32.totalorder %s16, 3
    %p158 = scmp.ne.s32.totalorder %s153, %s155
    %p159 = scmp.eq.s32.totalorder %s16, 0
    %p160 = por %p158, %p159
    %p161 = scmp.ne.s32.totalorder %s153, %s155
    %p162 = scmp.eq.s32.totalorder %s21, 3
    %p163 = por %p161, %p162
    %p164 = scmp.ne.s32.totalorder %s155, %s156
    %p165 = scmp.eq.s32.totalorder %s21, 0
    %p166 = por %p164, %p165
    %p167 = scmp.ne.s32.totalorder %s155, %s156
    %p168 = scmp.eq.s32.totalorder %s22, 3
    %p169 = por %p167, %p168
    %p171 = scmp.ne.s32.totalorder %s156, %s170
    %p172 = scmp.eq.s32.totalorder %s22, 0
    %p173 = por %p171, %p172
    %s175 = sadd.s32 %s174, 1
    %p178 = scmp.eq.s32.totalorder %s16, 3
    %p179 = scmp.ne.s32.totalorder %s174, %s176
    %p180 = scmp.eq.s32.totalorder %s16, 0
    %p181 = por %p179, %p180
    %p182 = scmp.ne.s32.totalorder %s174, %s176
    %p183 = scmp.eq.s32.totalorder %s21, 3
    %p184 = por %p182, %p183
    %p185 = scmp.ne.s32.totalorder %s176, %s177
    %p186 = scmp.eq.s32.totalorder %s21, 0
    %p187 = por %p185, %p186
    %p188 = scmp.ne.s32.totalorder %s176, %s177
    %p189 = scmp.eq.s32.totalorder %s22, 3
    %p190 = por %p188, %p189
    %p192 = scmp.ne.s32.totalorder %s177, %s191
    %p193 = scmp.eq.s32.totalorder %s22, 0
    %p194 = por %p192, %p193
    %s196 = sadd.s32 %s195, 1
    %p199 = scmp.eq.s32.totalorder %s16, 3
    %p200 = scmp.ne.s32.totalorder %s195, %s197
    %p201 = scmp.eq.s32.totalorder %s16, 0
    %p202 = por %p200, %p201
    %p203 = scmp.ne.s32.totalorder %s195, %s197
    %p204 = scmp.eq.s32.totalorder %s21, 3
    %p205 = por %p203, %p204
    %p206 = scmp.ne.s32.totalorder %s197, %s198
    %p207 = scmp.eq.s32.totalorder %s21, 0
    %p208 = por %p206, %p207
    %p209 = scmp.ne.s32.totalorder %s197, %s198
    %p210 = scmp.eq.s32.totalorder %s22, 3
    %p211 = por %p209, %p210
    %p213 = scmp.ne.s32.totalorder %s198, %s212
    %p214 = scmp.eq.s32.totalorder %s22, 0
    %p215 = por %p213, %p214
    %s216 = ssub.s32 %s23, %s35
    %s217 = ssub.s32 %s24, %s31
    %s218 = sor.u32 %s216, %s217
    %p219 = scmp.eq.s32.totalorder %s218, 0
    %s221 = sadd.s32 %s220, 1
    %s222 = scalar_select %p219, %s220, %s221
    %p225 = pneg %p219
    %p226 = scmp.eq.s32.totalorder %s16, 3
    %p227 = por %p225, %p226
    %p228 = scmp.ne.s32.totalorder %s220, %s223
    %p229 = scmp.eq.s32.totalorder %s16, 0
    %p230 = por %p228, %p229
    %p231 = scmp.ne.s32.totalorder %s220, %s223
    %p232 = scmp.eq.s32.totalorder %s21, 3
    %p233 = por %p231, %p232
    %p234 = scmp.ne.s32.totalorder %s223, %s224
    %p235 = scmp.eq.s32.totalorder %s21, 0
    %p236 = por %p234, %p235
    %p237 = scmp.ne.s32.totalorder %s223, %s224
    %p238 = scmp.eq.s32.totalorder %s22, 3
    %p239 = por %p237, %p238
    %p241 = scmp.ne.s32.totalorder %s224, %s240
    %p242 = scmp.eq.s32.totalorder %s22, 0
    %p243 = por %p241, %p242
    %p244 = scmp.le.s32.totalorder 1, %s16
    %p245 = scmp.lt.s32.totalorder %s16, 5
    %p246 = pnand %p244, %p245
    %p247 = pneg %p246
    // Predicated region
    $region9: #{deconv_apply.3} parent=5 // pred_check
      _
    $region10: #{deconv_apply.3} parent=5 // pred_check_branch
      %249 = sbr.rel (%p246) target = $region12
    $region11: #{deconv_apply.3} parent=5 // pred_region
      %s250 = ssub.s32 %s16, 1
      // Predicated region
      $region13: #{deconv_apply.3} parent=11 // pred_check
        %p251 = pneg %p103
      $region14: #{deconv_apply.3} parent=11 // pred_check_branch
        %253 = sbr.rel (%p251) target = $region16
      $region15: #{deconv_apply.3} parent=11 // pred_region
        _
      $region16: #{deconv_apply.3} parent=11 // pred_fallthru
        _
      // Predicated region
      $region17: #{deconv_apply.3} parent=11 // pred_check
        %p254 = pneg %p124
      $region18: #{deconv_apply.3} parent=11 // pred_check_branch
        %256 = sbr.rel (%p254) target = $region20
      $region19: #{deconv_apply.3} parent=11 // pred_region
        _
      $region20: #{deconv_apply.3} parent=11 // pred_fallthru
        _
      // Predicated region
      $region21: #{deconv_apply.3} parent=11 // pred_check
        %p257 = pneg %p145
      $region22: #{deconv_apply.3} parent=11 // pred_check_branch
        %259 = sbr.rel (%p257) target = $region24
      $region23: #{deconv_apply.3} parent=11 // pred_region
        _
      $region24: #{deconv_apply.3} parent=11 // pred_fallthru
        _
      // Predicated region
      $region25: #{deconv_apply.3} parent=11 // pred_check
        %p260 = pneg %p166
      $region26: #{deconv_apply.3} parent=11 // pred_check_branch
        %262 = sbr.rel (%p260) target = $region28
      $region27: #{deconv_apply.3} parent=11 // pred_region
        _
      $region28: #{deconv_apply.3} parent=11 // pred_fallthru
        _
      // Predicated region
      $region29: #{deconv_apply.3} parent=11 // pred_check
        %p263 = pneg %p187
      $region30: #{deconv_apply.3} parent=11 // pred_check_branch
        %265 = sbr.rel (%p263) target = $region32
      $region31: #{deconv_apply.3} parent=11 // pred_region
        _
      $region32: #{deconv_apply.3} parent=11 // pred_fallthru
        _
      // Predicated region
      $region33: #{deconv_apply.3} parent=11 // pred_check
        %p266 = pneg %p208
      $region34: #{deconv_apply.3} parent=11 // pred_check_branch
        %268 = sbr.rel (%p266) target = $region36
      $region35: #{deconv_apply.3} parent=11 // pred_region
        _
      $region36: #{deconv_apply.3} parent=11 // pred_fallthru
        _
    $region12: #{deconv_apply.3} parent=5 // pred_fallthru
      _
    %p269 = scmp.lt.s32.totalorder %s16, 4
    // Predicated region
    $region37: #{deconv_apply.3} parent=5 // pred_check
      %p270 = pneg %p269
    $region38: #{deconv_apply.3} parent=5 // pred_check_branch
      %272 = sbr.rel (%p270) target = $region40
    $region39: #{deconv_apply.3} parent=5 // pred_region
      // Predicated region
      $region41: #{deconv_apply.3} parent=39 // pred_check
        %p273 = pneg %p50
      $region42: #{deconv_apply.3} parent=39 // pred_check_branch
        %275 = sbr.rel (%p273) target = $region44
      $region43: #{deconv_apply.3} parent=39 // pred_region
        %p276 = scmp.lt.s32.totalorder %s23, 1
        %s277 = scalar_select %p276, %s23, 1
        %p278 = scmp.lt.s32.totalorder %s24, 1
        %s279 = scalar_select %p278, %s24, 1
        %s280 = smul.addr %s279, 5
        %s281 = smul.addr %s277, 10
        %s282 = sadd.s32 %s280, %s281
        %s283 = smul.addr %s282, 8
        %s284 = scalar_lea.vmem %s0, %s283
      $region44: #{deconv_apply.3} parent=39 // pred_fallthru
        _
      // Predicated region
      $region45: #{deconv_apply.3} parent=39 // pred_check
        %p285 = pneg %p76
      $region46: #{deconv_apply.3} parent=39 // pred_check_branch
        %287 = sbr.rel (%p285) target = $region48
      $region47: #{deconv_apply.3} parent=39 // pred_region
        %p288 = scmp.lt.s32.totalorder %s23, 1
        %s289 = scalar_select %p288, %s23, 1
        %s290 = scalar_lea.vmem %s1, %s289
      $region48: #{deconv_apply.3} parent=39 // pred_fallthru
        _
    $region40: #{deconv_apply.3} parent=5 // pred_fallthru
      _
    %p291 = scmp.le.s32.totalorder 1, %s16
    %p292 = scmp.lt.s32.totalorder %s16, 5
    %p293 = pnand %p291, %p292
    %p294 = pneg %p293
    // Predicated region
    $region49: #{deconv_apply.3} parent=5 // pred_check
      _
    $region50: #{deconv_apply.3} parent=5 // pred_check_branch
      %296 = sbr.rel (%p293) target = $region52
    $region51: #{deconv_apply.3} parent=5 // pred_region
      %s297 = ssub.s32 %s16, 1
      %p298 = scmp.lt.s32.totalorder %s25, 1
      %s299 = scalar_select %p298, %s25, 1
      %p300 = scmp.lt.s32.totalorder %s26, 1
      %s301 = scalar_select %p300, %s26, 1
      %s302 = smul.addr %s301, 5
      %s303 = smul.addr %s299, 10
      %s304 = sadd.s32 %s302, %s303
      %s305 = smul.addr %s304, 8
      %s306 = scalar_lea.vmem %s0, %s305
      %p307 = pneg %p56
      %p308 = pneg %p53
      %p309 = scmp.lt.s32.totalorder %s25, 1
      %s310 = scalar_select %p309, %s25, 1
      %s311 = scalar_lea.vmem %s1, %s310
      %p312 = pneg %p82
      %p313 = pneg %p79
      %p314 = pneg %p103
      %p315 = pneg %p100
      %p316 = pneg %p124
      %p317 = pneg %p121
      %p318 = pneg %p145
      %p319 = pneg %p142
      %p320 = pneg %p166
      %p321 = pneg %p163
      %p322 = pneg %p187
      %p323 = pneg %p184
      %p324 = pneg %p208
      %p325 = pneg %p205
      %p326 = pneg %p236
      %p327 = pneg %p233
      %p328 = scmp.lt.s32.totalorder %s25, 1
      %s329 = scalar_select %p328, %s25, 1
      %p330 = scmp.lt.s32.totalorder %s26, 1
      %s331 = scalar_select %p330, %s26, 1
      %s332 = smul.addr %s331, 5
      %s333 = smul.addr %s329, 10
      %s334 = sadd.s32 %s332, %s333
      %s335 = smul.addr %s334, 8
      %s336 = scalar_lea.vmem %s8, %s335
      %p337 = scmp.lt.s32.totalorder %s25, 1
      %s338 = scalar_select %p337, %s25, 1
      %p339 = scmp.lt.s32.totalorder %s26, 1
      %s340 = scalar_select %p339, %s26, 1
      %s341 = smul.addr %s340, 5
      %s342 = smul.addr %s338, 10
      %s343 = sadd.s32 %s341, %s342
      %s344 = smul.addr %s343, 8
      %s345 = scalar_lea.vmem %s0, %s344
      %p346 = scmp.lt.s32.totalorder %s25, 1
      %s347 = scalar_select %p346, %s25, 1
      %s348 = scalar_lea.vmem %s1, %s347
      %p349 = scmp.lt.s32.totalorder %s25, 1
      %s350 = scalar_select %p349, %s25, 1
      %p351 = scmp.lt.s32.totalorder %s26, 1
      %s352 = scalar_select %p351, %s26, 1
      %s353 = smul.addr %s352, 5
      %s354 = smul.addr %s350, 10
      %s355 = sadd.s32 %s353, %s354
      %s356 = smul.addr %s355, 8
      %s357 = scalar_lea.vmem %s8, %s356
      %v358 = vld [vmem:[%s348] sm:$0x1]
      %360 = vrot.lane.b32.xlu0 %v358, 112
      %v361 = vpop.permute.xlu0 %360
      %v363 = vadd.f32 %v358, %v361
      %364 = vrot.lane.b32.xlu0 %v358, 96
      %v365 = vpop.permute.xlu0 %364
      %v367 = vadd.f32 %v363, %v365
      %368 = vrot.lane.b32.xlu0 %v358, 80
      %v369 = vpop.permute.xlu0 %368
      %v371 = vadd.f32 %v367, %v369
      %v372 = vmul.f32 %v371, 0.00390625
      %v373 = vld [vmem:[#allocation2] sm:$0x1]
      %v374 = vld [vmem:[%s3] sm:$0x1]
      %376 = vset.pattern.permute.xlu0 0
      %377 = vperm.xlu0 %376, %v373
      %v378 = vpop.permute.xlu0 %377
      %v380 = vlaneseq
      %v381 = vshrl.u32 %v380, 7
      %v382 = vsub.s32 0, %v381
      %v383 = vrot.slane %v378, %v382
      %v384 = vmul.f32 %v383, %v374
      %v385 = vld [vmem:[%s4] sm:$0xff]
      %v386 = vld [vmem:[%s4 + $0x8] sm:$0xff]
      %vm387 = vcmask 130048
      %v389 = vsel %vm387, %v372, 0
      %391 = vmatprep.subr.mxu0 0.0
      %392 = vmatpush1.msra.mxu0 0.0
      %393 = vmatprep.subr.mxu0 0.0
      %394 = vmatpush1.msra.mxu0 0.0
      %395 = vmatprep.subr.mxu0 0.0
      %396 = vmatpush1.msra.mxu0 0.0
      %397 = vmatprep.subr.mxu0 0.0
      %398 = vmatpush1.msra.mxu0 0.0
      %399 = vmatprep.subr.mxu0 0.0
      %400 = vmatpush1.msra.mxu0 0.0
      %401 = vmatprep.subr.mxu0 0.0
      %402 = vmatpush1.msra.mxu0 0.0
      %403 = vmatprep.subr.mxu0 0.0
      %404 = vmatpush1.msra.mxu0 0.0
      %405 = vmatprep.subr.mxu0 0.0
      %406 = vmatpush1.msra.mxu0 0.0
      %407 = vmatprep.subr.mxu0 0.0
      %408 = vmatpush1.msra.mxu0 0.0
      %409 = vmatprep.subr.mxu0 0.0
      %410 = vmatpush1.msra.mxu0 0.0
      %411 = vmatprep.subr.mxu0 0.0
      %412 = vmatpush1.msra.mxu0 0.0
      %413 = vmatprep.subr.mxu0 0.0
      %414 = vmatpush1.msra.mxu0 0.0
      %415 = vmatprep.subr.mxu0 0.0
      %416 = vmatpush1.msra.mxu0 0.0
      %417 = vmatprep.subr.mxu0 0.0
      %418 = vmatpush1.msra.mxu0 0.0
      %419 = vmatprep.subr.mxu0 0.0
      %420 = vmatpush1.msra.mxu0 %v386
      %421 = vmatprep.subr.mxu0 0.0
      %422 = vmatpush1.msra.mxu0 %v385
      %423 = vmatprep.subr.mxu0 0.0
      %424 = vmatpush2.msra.mxu0 0.0
      %425 = vmatprep.subr.mxu0 0.0
      %426 = vmatpush2.msra.mxu0 0.0
      %427 = vmatprep.subr.mxu0 0.0
      %428 = vmatpush2.msra.mxu0 0.0
      %429 = vmatprep.subr.mxu0 0.0
      %430 = vmatpush2.msra.mxu0 0.0
      %431 = vmatprep.subr.mxu0 0.0
      %432 = vmatpush2.msra.mxu0 0.0
      %433 = vmatprep.subr.mxu0 0.0
      %434 = vmatpush2.msra.mxu0 0.0
      %435 = vmatprep.subr.mxu0 0.0
      %436 = vmatpush2.msra.mxu0 0.0
      %437 = vmatprep.subr.mxu0 0.0
      %438 = vmatpush2.msra.mxu0 0.0
      %439 = vmatprep.subr.mxu0 0.0
      %440 = vmatpush2.msra.mxu0 0.0
      %441 = vmatprep.subr.mxu0 0.0
      %442 = vmatpush2.msra.mxu0 0.0
      %443 = vmatprep.subr.mxu0 0.0
      %444 = vmatpush2.msra.mxu0 0.0
      %445 = vmatprep.subr.mxu0 0.0
      %446 = vmatpush2.msra.mxu0 0.0
      %447 = vmatprep.subr.mxu0 0.0
      %448 = vmatpush2.msra.mxu0 0.0
      %449 = vmatprep.subr.mxu0 0.0
      %450 = vmatpush2.msra.mxu0 0.0
      %451 = vmatprep.subr.mxu0 0.0
      %452 = vmatpush2.msra.mxu0 0.0
      %453 = vmatprep.subr.mxu0 0.0
      %454 = vmatpush2.msra.mxu0 0.0
      %455 = vmatprep.mubr.f32.mxu0 0.0
      %456 = vmatmul.mubr.f32.gmra.mxu0 %v389
      %v457 = vpop.f32.mrf.mxu0
      %v458 = vadd.f32 0.0, %v457
      %v459 = vpop.f32.mrf.mxu0
      %460 = vdwg.mxu0
      %v461 = vadd.f32 %v384, %v458
      %v462 = vld [vmem:[%s5] sm:$0x1]
      %v463 = vadd.f32 %v461, %v462
      %v464 = vmax.f32 %v463, 0.0
      %v465 = vld [vmem:[%s6] sm:$0x3]
      %v466 = vld [vmem:[%s7] sm:$0x1]
      %vm467 = vcmask 15360
      %v469 = vsel %vm467, %v464, 0
      %vm471 = vcmask 1041408
      %v473 = vsel %vm471, %v465, 0
      %475 = vmatprep.subr.mxu0 0.0
      %476 = vmatpush1.msra.mxu0 0.0
      %477 = vmatprep.subr.mxu0 0.0
      %478 = vmatpush1.msra.mxu0 0.0
      %479 = vmatprep.subr.mxu0 0.0
      %480 = vmatpush1.msra.mxu0 0.0
      %481 = vmatprep.subr.mxu0 0.0
      %482 = vmatpush1.msra.mxu0 0.0
      %483 = vmatprep.subr.mxu0 0.0
      %484 = vmatpush1.msra.mxu0 0.0
      %485 = vmatprep.subr.mxu0 0.0
      %486 = vmatpush1.msra.mxu0 0.0
      %487 = vmatprep.subr.mxu0 0.0
      %488 = vmatpush1.msra.mxu0 0.0
      %489 = vmatprep.subr.mxu0 0.0
      %490 = vmatpush1.msra.mxu0 0.0
      %491 = vmatprep.subr.mxu0 0.0
      %492 = vmatpush1.msra.mxu0 0.0
      %493 = vmatprep.subr.mxu0 0.0
      %494 = vmatpush1.msra.mxu0 0.0
      %495 = vmatprep.subr.mxu0 0.0
      %496 = vmatpush1.msra.mxu0 0.0
      %497 = vmatprep.subr.mxu0 0.0
      %498 = vmatpush1.msra.mxu0 0.0
      %499 = vmatprep.subr.mxu0 0.0
      %500 = vmatpush1.msra.mxu0 0.0
      %501 = vmatprep.subr.mxu0 0.0
      %502 = vmatpush1.msra.mxu0 0.0
      %503 = vmatprep.subr.mxu0 0.0
      %504 = vmatpush1.msra.mxu0 0.0
      %505 = vmatprep.subr.mxu0 0.0
      %506 = vmatpush1.msra.mxu0 %v473
      %507 = vmatprep.subr.mxu0 0.0
      %508 = vmatpush2.msra.mxu0 0.0
      %509 = vmatprep.subr.mxu0 0.0
      %510 = vmatpush2.msra.mxu0 0.0
      %511 = vmatprep.subr.mxu0 0.0
      %512 = vmatpush2.msra.mxu0 0.0
      %513 = vmatprep.subr.mxu0 0.0
      %514 = vmatpush2.msra.mxu0 0.0
      %515 = vmatprep.subr.mxu0 0.0
      %516 = vmatpush2.msra.mxu0 0.0
      %517 = vmatprep.subr.mxu0 0.0
      %518 = vmatpush2.msra.mxu0 0.0
      %519 = vmatprep.subr.mxu0 0.0
      %520 = vmatpush2.msra.mxu0 0.0
      %521 = vmatprep.subr.mxu0 0.0
      %522 = vmatpush2.msra.mxu0 0.0
      %523 = vmatprep.subr.mxu0 0.0
      %524 = vmatpush2.msra.mxu0 0.0
      %525 = vmatprep.subr.mxu0 0.0
      %526 = vmatpush2.msra.mxu0 0.0
      %527 = vmatprep.subr.mxu0 0.0
      %528 = vmatpush2.msra.mxu0 0.0
      %529 = vmatprep.subr.mxu0 0.0
      %530 = vmatpush2.msra.mxu0 0.0
      %531 = vmatprep.subr.mxu0 0.0
      %532 = vmatpush2.msra.mxu0 0.0
      %533 = vmatprep.subr.mxu0 0.0
      %534 = vmatpush2.msra.mxu0 0.0
      %535 = vmatprep.subr.mxu0 0.0
      %536 = vmatpush2.msra.mxu0 0.0
      %537 = vmatprep.subr.mxu0 0.0
      %538 = vmatpush2.msra.mxu0 0.0
      %539 = vmatprep.mubr.f32.mxu0 0.0
      %540 = vmatmul.mubr.f32.gmra.mxu0 %v469
      %v541 = vpop.f32.mrf.mxu0
      %v542 = vadd.f32 %v466, %v541
      %v543 = vpop.f32.mrf.mxu0
      %544 = vdwg.mxu0
      %v545 = vxor.u32 %v542, 2147483648
      %v546 = vmul.f32 %v545, 1.442695
      %v547 = vpow.pop %v546
      %v548 = vadd.f32 %v547, 1.0
      %v549 = vrcp.pop %v548
      %v550 = vmul.f32 1.0, %v549
      %552 = vrot.lane.b32.xlu0 %v550, 16
      %v553 = vpop.permute.xlu0 %552
      %555 = vrot.lane.b32.xlu0 %v550, 32
      %v556 = vpop.permute.xlu0 %555
      %558 = vrot.lane.b32.xlu0 %v550, 48
      %v559 = vpop.permute.xlu0 %558
      %v561 = vsel %vm387, %v550, %v553
      %vm562 = vcmask 261120
      %v563 = vsel %vm562, %v561, %v556
      %vm564 = vcmask 392192
      %v565 = vsel %vm564, %v563, %v559
      %vm566 = vcmask 523264
      %v567 = vsel %vm566, %v565, 0.0
      %v568 = vld [vmem:[%s345] sm:$0xff]
      %v569 = vld [vmem:[%s345 + $0x8] sm:$0xff]
      %v570 = vld [vmem:[%s345 + $0x10] sm:$0xff]
      %v571 = vld [vmem:[%s345 + $0x18] sm:$0xff]
      %v572 = vld [vmem:[%s345 + $0x20] sm:$0xff]
      %v573 = vlaneseq
      %v574 = vshrl.u32 %v573, 7
      %v575 = vsub.s32 0, %v574
      %v576 = vrot.slane %v567, %v575
      %v577 = vmul.f32 %v568, %v576
      %v578 = vmul.f32 %v569, %v576
      %v579 = vmul.f32 %v570, %v576
      %v580 = vmul.f32 %v571, %v576
      %v581 = vmul.f32 %v572, %v576
      %582 = vst [vmem:[%s357] sm:$0xff] %v577
      %583 = vst [vmem:[%s357 + $0x8] sm:$0xff] %v578
      %584 = vst [vmem:[%s357 + $0x10] sm:$0xff] %v579
      %585 = vst [vmem:[%s357 + $0x18] sm:$0xff] %v580
      %586 = vst [vmem:[%s357 + $0x20] sm:$0xff] %v581
      %p587 = scmp.lt.s32.totalorder %s25, 1
      %s588 = scalar_select %p587, %s25, 1
      %p589 = scmp.lt.s32.totalorder %s26, 1
      %s590 = scalar_select %p589, %s26, 1
      %s591 = smul.addr %s590, 5
      %s592 = smul.addr %s588, 10
      %s593 = sadd.s32 %s591, %s592
      %s594 = smul.addr %s593, 8
      %s595 = scalar_lea.vmem %s8, %s594
      // Predicated region
      $region53: #{deconv_apply.3} parent=51 // pred_check
        %p596 = pneg %p233
      $region54: #{deconv_apply.3} parent=51 // pred_check_branch
        %598 = sbr.rel (%p596) target = $region56
      $region55: #{deconv_apply.3} parent=51 // pred_region
        _
      $region56: #{deconv_apply.3} parent=51 // pred_fallthru
        _
    $region52: #{deconv_apply.3} parent=5 // pred_fallthru
      _
    %p599 = scmp.le.s32.totalorder 2, %s16
    // Predicated region
    $region57: #{deconv_apply.3} parent=5 // pred_check
      %p600 = pneg %p599
    $region58: #{deconv_apply.3} parent=5 // pred_check_branch
      %602 = sbr.rel (%p600) target = $region60
    $region59: #{deconv_apply.3} parent=5 // pred_region
      %s603 = ssub.s32 %s16, 2
      // Predicated region
      $region61: #{deconv_apply.3} parent=59 // pred_check
        %p604 = pneg %p239
      $region62: #{deconv_apply.3} parent=59 // pred_check_branch
        %606 = sbr.rel (%p604) target = $region64
      $region63: #{deconv_apply.3} parent=59 // pred_region
        %p607 = scmp.lt.s32.totalorder %s27, 1
        %s608 = scalar_select %p607, %s27, 1
        %p609 = scmp.lt.s32.totalorder %s28, 1
        %s610 = scalar_select %p609, %s28, 1
        %s611 = smul.addr %s610, 5
        %s612 = smul.addr %s608, 10
        %s613 = sadd.s32 %s611, %s612
        %s614 = smul.addr %s613, 8
        %s615 = scalar_lea.vmem %s8, %s614
      $region64: #{deconv_apply.3} parent=59 // pred_fallthru
        _
    $region60: #{deconv_apply.3} parent=5 // pred_fallthru
      _
  $region6: #{deconv_apply.3} parent=0 // loop_footer
    %s20 = sadd.s32 1, %s16
  $region7: #{deconv_apply.3} parent=0 // loop_footer_branch
    %15 = sbr.rel target = $region3
  $region8: #{deconv_apply.3} parent=0 // loop_exit
    _

// kernel: deconv_apply.2
$region0: #{deconv_apply.2}
  #allocation0 [shape = 'u32[]', space=smem, size = 0x4, offset = 0x4, fixed_abs, tag = 'smem constant byte address 0x4 - core index']
  #allocation1 [shape = 'u32[144,128]{1,0:T(1,128)}', space=vmem, size = 0x12000, scoped, tag = 'internal scratch']
  %s0 = inlined_call_operand.vmem [shape: f32[2,2,62,8], index: 0, kind: input, shape index: {}]
  %s1 = inlined_call_operand.vmem [shape: f32[72,128], index: 1, kind: input, shape index: {}]
  %s2 = inlined_call_operand.vmem [shape: f32[1,128], index: 2, kind: input, shape index: {}]
  %s3 = inlined_call_operand.vmem [shape: f32[1,128], index: 3, kind: input, shape index: {}]
  %s4 = inlined_call_operand.vmem [shape: f32[40,1], index: 4, kind: input, shape index: {}]
  %s5 = inlined_call_operand.vmem [shape: f32[2,2,40,128], index: 5, kind: output, shape index: {0}]
  %s6 = inlined_call_operand.vmem [shape: f32[2,2,1,128], index: 6, kind: output, shape index: {1}]
  %7 = xla_tuple %s5, %s6
  %s8 = sld [smem:[#allocation0]]
  $region61: #{deconv_apply.2} parent=0
    _
  %s10 = ssub.s32 1, %s8
  %s11 = scalar_select 0, %s10, %s8
  loop: start=0, step=1, limit=6
  $region2: #{deconv_apply.2} parent=0 // loop_pre_header
    _
  $region3: #{deconv_apply.2} parent=0 // loop_header
    %s13 = sphi 0, %s17
    %p14 = scmp.ge.s32.totalorder %s13, 6
    %s20 = sphi 0, %s32
    %s21 = sphi 0, %s28
    %s22 = sphi 0, %s20
    %s23 = sphi 0, %s21
    %s24 = sphi 0, %s22
    %s25 = sphi 0, %s23
    %s37 = sphi 0, %s39
    %s40 = sphi 0, %s37
    %s41 = sphi 0, %s40
    %s57 = sphi 0, %s41
    %s61 = sphi 0, %s61
    %s63 = sphi 0, %s61
    %s64 = sphi 0, %s63
    %s78 = sphi 0, %s64
    %s82 = sphi 0, %s82
    %s84 = sphi 0, %s82
    %s85 = sphi 0, %s84
    %s99 = sphi 0, %s85
    %s103 = sphi 0, %s103
    %s105 = sphi 0, %s103
    %s106 = sphi 0, %s105
    %s120 = sphi 0, %s106
    %s124 = sphi 0, %s124
    %s126 = sphi 0, %s124
    %s127 = sphi 0, %s126
    %s141 = sphi 0, %s127
    %s149 = sphi 0, %s151
    %s152 = sphi 0, %s149
    %s153 = sphi 0, %s152
    %s169 = sphi 0, %s153
    %s177 = sphi 0, %s179
    %s180 = sphi 0, %s177
    %s181 = sphi 0, %s180
    %s197 = sphi 0, %s181
  $region4: #{deconv_apply.2} parent=0 // loop_header_branch
    %16 = sbr.rel (%p14) target = $region8
  $region5: #{deconv_apply.2} parent=0 // loop_body
    %s18 = ssub.s32 %s13, 1
    %s19 = ssub.s32 %s13, 2
    %s26 = sadd.s32 1, %s21
    %p27 = scmp.ge.s32.totalorder %s26, 2
    %s28 = scalar_select %p27, 0, %s26
    %s29 = sadd.s32 1, %s20
    %s30 = scalar_select %p27, %s29, %s20
    %p31 = scmp.ge.s32.totalorder %s30, 2
    %s32 = scalar_select %p31, 0, %s30
    %s33 = ssub.s32 %s20, %s32
    %s34 = ssub.s32 %s21, %s28
    %s35 = sor.u32 %s33, %s34
    %p36 = scmp.eq.s32.totalorder %s35, 0
    %s38 = sadd.s32 %s37, 1
    %s39 = scalar_select %p36, %s37, %s38
    %p42 = pneg %p36
    %p43 = scmp.eq.s32.totalorder %s13, 3
    %p44 = por %p42, %p43
    %p45 = scmp.ne.s32.totalorder %s37, %s40
    %p46 = scmp.eq.s32.totalorder %s13, 0
    %p47 = por %p45, %p46
    %p48 = scmp.ne.s32.totalorder %s37, %s40
    %p49 = scmp.eq.s32.totalorder %s18, 3
    %p50 = por %p48, %p49
    %p51 = scmp.ne.s32.totalorder %s40, %s41
    %p52 = scmp.eq.s32.totalorder %s18, 0
    %p53 = por %p51, %p52
    %p54 = scmp.ne.s32.totalorder %s40, %s41
    %p55 = scmp.eq.s32.totalorder %s19, 3
    %p56 = por %p54, %p55
    %p58 = scmp.ne.s32.totalorder %s41, %s57
    %p59 = scmp.eq.s32.totalorder %s19, 0
    %p60 = por %p58, %p59
    %s62 = sadd.s32 %s61, 1
    %p65 = scmp.eq.s32.totalorder %s13, 3
    %p66 = scmp.ne.s32.totalorder %s61, %s63
    %p67 = scmp.eq.s32.totalorder %s13, 0
    %p68 = por %p66, %p67
    %p69 = scmp.ne.s32.totalorder %s61, %s63
    %p70 = scmp.eq.s32.totalorder %s18, 3
    %p71 = por %p69, %p70
    %p72 = scmp.ne.s32.totalorder %s63, %s64
    %p73 = scmp.eq.s32.totalorder %s18, 0
    %p74 = por %p72, %p73
    %p75 = scmp.ne.s32.totalorder %s63, %s64
    %p76 = scmp.eq.s32.totalorder %s19, 3
    %p77 = por %p75, %p76
    %p79 = scmp.ne.s32.totalorder %s64, %s78
    %p80 = scmp.eq.s32.totalorder %s19, 0
    %p81 = por %p79, %p80
    %s83 = sadd.s32 %s82, 1
    %p86 = scmp.eq.s32.totalorder %s13, 3
    %p87 = scmp.ne.s32.totalorder %s82, %s84
    %p88 = scmp.eq.s32.totalorder %s13, 0
    %p89 = por %p87, %p88
    %p90 = scmp.ne.s32.totalorder %s82, %s84
    %p91 = scmp.eq.s32.totalorder %s18, 3
    %p92 = por %p90, %p91
    %p93 = scmp.ne.s32.totalorder %s84, %s85
    %p94 = scmp.eq.s32.totalorder %s18, 0
    %p95 = por %p93, %p94
    %p96 = scmp.ne.s32.totalorder %s84, %s85
    %p97 = scmp.eq.s32.totalorder %s19, 3
    %p98 = por %p96, %p97
    %p100 = scmp.ne.s32.totalorder %s85, %s99
    %p101 = scmp.eq.s32.totalorder %s19, 0
    %p102 = por %p100, %p101
    %s104 = sadd.s32 %s103, 1
    %p107 = scmp.eq.s32.totalorder %s13, 3
    %p108 = scmp.ne.s32.totalorder %s103, %s105
    %p109 = scmp.eq.s32.totalorder %s13, 0
    %p110 = por %p108, %p109
    %p111 = scmp.ne.s32.totalorder %s103, %s105
    %p112 = scmp.eq.s32.totalorder %s18, 3
    %p113 = por %p111, %p112
    %p114 = scmp.ne.s32.totalorder %s105, %s106
    %p115 = scmp.eq.s32.totalorder %s18, 0
    %p116 = por %p114, %p115
    %p117 = scmp.ne.s32.totalorder %s105, %s106
    %p118 = scmp.eq.s32.totalorder %s19, 3
    %p119 = por %p117, %p118
    %p121 = scmp.ne.s32.totalorder %s106, %s120
    %p122 = scmp.eq.s32.totalorder %s19, 0
    %p123 = por %p121, %p122
    %s125 = sadd.s32 %s124, 1
    %p128 = scmp.eq.s32.totalorder %s13, 3
    %p129 = scmp.ne.s32.totalorder %s124, %s126
    %p130 = scmp.eq.s32.totalorder %s13, 0
    %p131 = por %p129, %p130
    %p132 = scmp.ne.s32.totalorder %s124, %s126
    %p133 = scmp.eq.s32.totalorder %s18, 3
    %p134 = por %p132, %p133
    %p135 = scmp.ne.s32.totalorder %s126, %s127
    %p136 = scmp.eq.s32.totalorder %s18, 0
    %p137 = por %p135, %p136
    %p138 = scmp.ne.s32.totalorder %s126, %s127
    %p139 = scmp.eq.s32.totalorder %s19, 3
    %p140 = por %p138, %p139
    %p142 = scmp.ne.s32.totalorder %s127, %s141
    %p143 = scmp.eq.s32.totalorder %s19, 0
    %p144 = por %p142, %p143
    %s145 = ssub.s32 %s20, %s32
    %s146 = ssub.s32 %s21, %s28
    %s147 = sor.u32 %s145, %s146
    %p148 = scmp.eq.s32.totalorder %s147, 0
    %s150 = sadd.s32 %s149, 1
    %s151 = scalar_select %p148, %s149, %s150
    %p154 = pneg %p148
    %p155 = scmp.eq.s32.totalorder %s13, 3
    %p156 = por %p154, %p155
    %p157 = scmp.ne.s32.totalorder %s149, %s152
    %p158 = scmp.eq.s32.totalorder %s13, 0
    %p159 = por %p157, %p158
    %p160 = scmp.ne.s32.totalorder %s149, %s152
    %p161 = scmp.eq.s32.totalorder %s18, 3
    %p162 = por %p160, %p161
    %p163 = scmp.ne.s32.totalorder %s152, %s153
    %p164 = scmp.eq.s32.totalorder %s18, 0
    %p165 = por %p163, %p164
    %p166 = scmp.ne.s32.totalorder %s152, %s153
    %p167 = scmp.eq.s32.totalorder %s19, 3
    %p168 = por %p166, %p167
    %p170 = scmp.ne.s32.totalorder %s153, %s169
    %p171 = scmp.eq.s32.totalorder %s19, 0
    %p172 = por %p170, %p171
    %s173 = ssub.s32 %s20, %s32
    %s174 = ssub.s32 %s21, %s28
    %s175 = sor.u32 %s173, %s174
    %p176 = scmp.eq.s32.totalorder %s175, 0
    %s178 = sadd.s32 %s177, 1
    %s179 = scalar_select %p176, %s177, %s178
    %p182 = pneg %p176
    %p183 = scmp.eq.s32.totalorder %s13, 3
    %p184 = por %p182, %p183
    %p185 = scmp.ne.s32.totalorder %s177, %s180
    %p186 = scmp.eq.s32.totalorder %s13, 0
    %p187 = por %p185, %p186
    %p188 = scmp.ne.s32.totalorder %s177, %s180
    %p189 = scmp.eq.s32.totalorder %s18, 3
    %p190 = por %p188, %p189
    %p191 = scmp.ne.s32.totalorder %s180, %s181
    %p192 = scmp.eq.s32.totalorder %s18, 0
    %p193 = por %p191, %p192
    %p194 = scmp.ne.s32.totalorder %s180, %s181
    %p195 = scmp.eq.s32.totalorder %s19, 3
    %p196 = por %p194, %p195
    %p198 = scmp.ne.s32.totalorder %s181, %s197
    %p199 = scmp.eq.s32.totalorder %s19, 0
    %p200 = por %p198, %p199
    %p201 = scmp.le.s32.totalorder 1, %s13
    %p202 = scmp.lt.s32.totalorder %s13, 5
    %p203 = pnand %p201, %p202
    %p204 = pneg %p203
    // Predicated region
    $region9: #{deconv_apply.2} parent=5 // pred_check
      _
    $region10: #{deconv_apply.2} parent=5 // pred_check_branch
      %206 = sbr.rel (%p203) target = $region12
    $region11: #{deconv_apply.2} parent=5 // pred_region
      %s207 = ssub.s32 %s13, 1
      // Predicated region
      $region13: #{deconv_apply.2} parent=11 // pred_check
        %p208 = pneg %p74
      $region14: #{deconv_apply.2} parent=11 // pred_check_branch
        %210 = sbr.rel (%p208) target = $region16
      $region15: #{deconv_apply.2} parent=11 // pred_region
        _
      $region16: #{deconv_apply.2} parent=11 // pred_fallthru
        _
      // Predicated region
      $region17: #{deconv_apply.2} parent=11 // pred_check
        %p211 = pneg %p95
      $region18: #{deconv_apply.2} parent=11 // pred_check_branch
        %213 = sbr.rel (%p211) target = $region20
      $region19: #{deconv_apply.2} parent=11 // pred_region
        _
      $region20: #{deconv_apply.2} parent=11 // pred_fallthru
        _
      // Predicated region
      $region21: #{deconv_apply.2} parent=11 // pred_check
        %p214 = pneg %p116
      $region22: #{deconv_apply.2} parent=11 // pred_check_branch
        %216 = sbr.rel (%p214) target = $region24
      $region23: #{deconv_apply.2} parent=11 // pred_region
        _
      $region24: #{deconv_apply.2} parent=11 // pred_fallthru
        _
      // Predicated region
      $region25: #{deconv_apply.2} parent=11 // pred_check
        %p217 = pneg %p137
      $region26: #{deconv_apply.2} parent=11 // pred_check_branch
        %219 = sbr.rel (%p217) target = $region28
      $region27: #{deconv_apply.2} parent=11 // pred_region
        _
      $region28: #{deconv_apply.2} parent=11 // pred_fallthru
        _
    $region12: #{deconv_apply.2} parent=5 // pred_fallthru
      _
    %p220 = scmp.lt.s32.totalorder %s13, 4
    // Predicated region
    $region29: #{deconv_apply.2} parent=5 // pred_check
      %p221 = pneg %p220
    $region30: #{deconv_apply.2} parent=5 // pred_check_branch
      %223 = sbr.rel (%p221) target = $region32
    $region31: #{deconv_apply.2} parent=5 // pred_region
      // Predicated region
      $region33: #{deconv_apply.2} parent=31 // pred_check
        %p224 = pneg %p47
      $region34: #{deconv_apply.2} parent=31 // pred_check_branch
        %226 = sbr.rel (%p224) target = $region36
      $region35: #{deconv_apply.2} parent=31 // pred_region
        %p227 = scmp.lt.s32.totalorder %s20, 1
        %s228 = scalar_select %p227, %s20, 1
        %p229 = scmp.lt.s32.totalorder %s21, 1
        %s230 = scalar_select %p229, %s21, 1
        %s231 = smul.addr %s230, 8
        %s232 = smul.addr %s228, 16
        %s233 = sadd.s32 %s231, %s232
        %s234 = smul.addr %s233, 8
        %s235 = scalar_lea.vmem %s0, %s234
      $region36: #{deconv_apply.2} parent=31 // pred_fallthru
        _
    $region32: #{deconv_apply.2} parent=5 // pred_fallthru
      _
    %p236 = scmp.le.s32.totalorder 1, %s13
    %p237 = scmp.lt.s32.totalorder %s13, 5
    %p238 = pnand %p236, %p237
    %p239 = pneg %p238
    // Predicated region
    $region37: #{deconv_apply.2} parent=5 // pred_check
      _
    $region38: #{deconv_apply.2} parent=5 // pred_check_branch
      %241 = sbr.rel (%p238) target = $region40
    $region39: #{deconv_apply.2} parent=5 // pred_region
      %s242 = ssub.s32 %s13, 1
      %p243 = scmp.lt.s32.totalorder %s22, 1
      %s244 = scalar_select %p243, %s22, 1
      %p245 = scmp.lt.s32.totalorder %s23, 1
      %s246 = scalar_select %p245, %s23, 1
      %s247 = smul.addr %s246, 8
      %s248 = smul.addr %s244, 16
      %s249 = sadd.s32 %s247, %s248
      %s250 = smul.addr %s249, 8
      %s251 = scalar_lea.vmem %s0, %s250
      %p252 = pneg %p53
      %p253 = pneg %p50
      %p254 = pneg %p74
      %p255 = pneg %p71
      %p256 = pneg %p95
      %p257 = pneg %p92
      %p258 = pneg %p116
      %p259 = pneg %p113
      %p260 = pneg %p137
      %p261 = pneg %p134
      %p262 = pneg %p165
      %p263 = pneg %p162
      %p264 = scmp.lt.s32.totalorder %s22, 1
      %s265 = scalar_select %p264, %s22, 1
      %p266 = scmp.lt.s32.totalorder %s23, 1
      %s267 = scalar_select %p266, %s23, 1
      %s268 = smul.addr %s267, 5
      %s269 = smul.addr %s265, 10
      %s270 = sadd.s32 %s268, %s269
      %s271 = smul.addr %s270, 8
      %s272 = scalar_lea.vmem %s5, %s271
      %p273 = pneg %p193
      %p274 = pneg %p190
      %p275 = scmp.lt.s32.totalorder %s22, 1
      %s276 = scalar_select %p275, %s22, 1
      %p277 = scmp.lt.s32.totalorder %s23, 1
      %s278 = scalar_select %p277, %s23, 1
      %s279 = smul.addr %s276, 2
      %s280 = sadd.s32 %s278, %s279
      %s281 = scalar_lea.vmem %s6, %s280
      %p282 = scmp.lt.s32.totalorder %s22, 1
      %s283 = scalar_select %p282, %s22, 1
      %p284 = scmp.lt.s32.totalorder %s23, 1
      %s285 = scalar_select %p284, %s23, 1
      %s286 = smul.addr %s285, 8
      %s287 = smul.addr %s283, 16
      %s288 = sadd.s32 %s286, %s287
      %s289 = smul.addr %s288, 8
      %s290 = scalar_lea.vmem %s0, %s289
      %p291 = scmp.lt.s32.totalorder %s22, 1
      %s292 = scalar_select %p291, %s22, 1
      %p293 = scmp.lt.s32.totalorder %s23, 1
      %s294 = scalar_select %p293, %s23, 1
      %s295 = smul.addr %s294, 5
      %s296 = smul.addr %s292, 10
      %s297 = sadd.s32 %s295, %s296
      %s298 = smul.addr %s297, 8
      %s299 = scalar_lea.vmem %s5, %s298
      %p300 = scmp.lt.s32.totalorder %s22, 1
      %s301 = scalar_select %p300, %s22, 1
      %p302 = scmp.lt.s32.totalorder %s23, 1
      %s303 = scalar_select %p302, %s23, 1
      %s304 = smul.addr %s301, 2
      %s305 = sadd.s32 %s303, %s304
      %s306 = scalar_lea.vmem %s6, %s305
      %v307 = vld [vmem:[%s290] sm:$0xff]
      %v308 = vld [vmem:[%s290 + $0x8] sm:$0xff]
      %v309 = vld [vmem:[%s290 + $0x10] sm:$0xff]
      %v310 = vld [vmem:[%s290 + $0x18] sm:$0xff]
      %v311 = vld [vmem:[%s290 + $0x20] sm:$0xff]
      %v312 = vld [vmem:[%s290 + $0x28] sm:$0xff]
      %v313 = vld [vmem:[%s290 + $0x30] sm:$0xff]
      %v314 = vld [vmem:[%s290 + $0x38] sm:$0x3f]
      %vm321 = vcmask 1046528
      %v322 = vrot.slane %v307, 1
      %v323 = vrot.slane %v308, 1
      %v324 = vsel %vm321, %v322, %v323
      %v325 = vrot.slane %v309, 1
      %v326 = vsel %vm321, %v323, %v325
      %v327 = vrot.slane %v310, 1
      %v328 = vsel %vm321, %v325, %v327
      %v329 = vrot.slane %v311, 1
      %v330 = vsel %vm321, %v327, %v329
      %v331 = vrot.slane %v312, 1
      %v332 = vsel %vm321, %v329, %v331
      %333 = vrot.lane.b32.xlu0 %v324, 8
      %v334 = vpop.permute.xlu0 %333
      %335 = vrot.lane.b32.xlu0 %v326, 8
      %v336 = vpop.permute.xlu0 %335
      %337 = vrot.lane.b32.xlu0 %v328, 8
      %v338 = vpop.permute.xlu0 %337
      %339 = vrot.lane.b32.xlu0 %v330, 8
      %v340 = vpop.permute.xlu0 %339
      %341 = vrot.lane.b32.xlu0 %v332, 8
      %v342 = vpop.permute.xlu0 %341
      %vm348 = vcmask 1045504
      %v349 = vrot.slane %v307, 2
      %v350 = vrot.slane %v308, 2
      %v351 = vsel %vm348, %v349, %v350
      %v352 = vrot.slane %v309, 2
      %v353 = vsel %vm348, %v350, %v352
      %v354 = vrot.slane %v310, 2
      %v355 = vsel %vm348, %v352, %v354
      %v356 = vrot.slane %v311, 2
      %v357 = vsel %vm348, %v354, %v356
      %v358 = vrot.slane %v312, 2
      %v359 = vsel %vm348, %v356, %v358
      %360 = vrot.lane.b32.xlu0 %v351, 16
      %v361 = vpop.permute.xlu0 %360
      %362 = vrot.lane.b32.xlu0 %v353, 16
      %v363 = vpop.permute.xlu0 %362
      %364 = vrot.lane.b32.xlu0 %v355, 16
      %v365 = vpop.permute.xlu0 %364
      %366 = vrot.lane.b32.xlu0 %v357, 16
      %v367 = vpop.permute.xlu0 %366
      %368 = vrot.lane.b32.xlu0 %v359, 16
      %v369 = vpop.permute.xlu0 %368
      %v376 = vrot.slane %v313, 2
      %v377 = vsel %vm348, %v358, %v376
      %378 = vrot.lane.b32.xlu0 %v353, 24
      %v379 = vpop.permute.xlu0 %378
      %380 = vrot.lane.b32.xlu0 %v355, 24
      %v381 = vpop.permute.xlu0 %380
      %382 = vrot.lane.b32.xlu0 %v357, 24
      %v383 = vpop.permute.xlu0 %382
      %384 = vrot.lane.b32.xlu0 %v359, 24
      %v385 = vpop.permute.xlu0 %384
      %386 = vrot.lane.b32.xlu0 %v377, 24
      %v387 = vpop.permute.xlu0 %386
      %vm393 = vcmask 1044480
      %v394 = vrot.slane %v308, 3
      %v395 = vrot.slane %v309, 3
      %v396 = vsel %vm393, %v394, %v395
      %v397 = vrot.slane %v310, 3
      %v398 = vsel %vm393, %v395, %v397
      %v399 = vrot.slane %v311, 3
      %v400 = vsel %vm393, %v397, %v399
      %v401 = vrot.slane %v312, 3
      %v402 = vsel %vm393, %v399, %v401
      %v403 = vrot.slane %v313, 3
      %v404 = vsel %vm393, %v401, %v403
      %405 = vrot.lane.b32.xlu0 %v396, 32
      %v406 = vpop.permute.xlu0 %405
      %407 = vrot.lane.b32.xlu0 %v398, 32
      %v408 = vpop.permute.xlu0 %407
      %409 = vrot.lane.b32.xlu0 %v400, 32
      %v410 = vpop.permute.xlu0 %409
      %411 = vrot.lane.b32.xlu0 %v402, 32
      %v412 = vpop.permute.xlu0 %411
      %413 = vrot.lane.b32.xlu0 %v404, 32
      %v414 = vpop.permute.xlu0 %413
      %vm420 = vcmask 1043456
      %v421 = vrot.slane %v308, 4
      %v422 = vrot.slane %v309, 4
      %v423 = vsel %vm420, %v421, %v422
      %v424 = vrot.slane %v310, 4
      %v425 = vsel %vm420, %v422, %v424
      %v426 = vrot.slane %v311, 4
      %v427 = vsel %vm420, %v424, %v426
      %v428 = vrot.slane %v312, 4
      %v429 = vsel %vm420, %v426, %v428
      %v430 = vrot.slane %v313, 4
      %v431 = vsel %vm420, %v428, %v430
      %432 = vrot.lane.b32.xlu0 %v423, 40
      %v433 = vpop.permute.xlu0 %432
      %434 = vrot.lane.b32.xlu0 %v425, 40
      %v435 = vpop.permute.xlu0 %434
      %436 = vrot.lane.b32.xlu0 %v427, 40
      %v437 = vpop.permute.xlu0 %436
      %438 = vrot.lane.b32.xlu0 %v429, 40
      %v439 = vpop.permute.xlu0 %438
      %440 = vrot.lane.b32.xlu0 %v431, 40
      %v441 = vpop.permute.xlu0 %440
      %v448 = vrot.slane %v314, 4
      %v449 = vsel %vm420, %v430, %v448
      %450 = vrot.lane.b32.xlu0 %v425, 48
      %v451 = vpop.permute.xlu0 %450
      %452 = vrot.lane.b32.xlu0 %v427, 48
      %v453 = vpop.permute.xlu0 %452
      %454 = vrot.lane.b32.xlu0 %v429, 48
      %v455 = vpop.permute.xlu0 %454
      %456 = vrot.lane.b32.xlu0 %v431, 48
      %v457 = vpop.permute.xlu0 %456
      %458 = vrot.lane.b32.xlu0 %v449, 48
      %v459 = vpop.permute.xlu0 %458
      %vm465 = vcmask 1042432
      %v466 = vrot.slane %v309, 5
      %v467 = vrot.slane %v310, 5
      %v468 = vsel %vm465, %v466, %v467
      %v469 = vrot.slane %v311, 5
      %v470 = vsel %vm465, %v467, %v469
      %v471 = vrot.slane %v312, 5
      %v472 = vsel %vm465, %v469, %v471
      %v473 = vrot.slane %v313, 5
      %v474 = vsel %vm465, %v471, %v473
      %v475 = vrot.slane %v314, 5
      %v476 = vsel %vm465, %v473, %v475
      %477 = vrot.lane.b32.xlu0 %v468, 56
      %v478 = vpop.permute.xlu0 %477
      %479 = vrot.lane.b32.xlu0 %v470, 56
      %v480 = vpop.permute.xlu0 %479
      %481 = vrot.lane.b32.xlu0 %v472, 56
      %v482 = vpop.permute.xlu0 %481
      %483 = vrot.lane.b32.xlu0 %v474, 56
      %v484 = vpop.permute.xlu0 %483
      %485 = vrot.lane.b32.xlu0 %v476, 56
      %v486 = vpop.permute.xlu0 %485
      %vm492 = vcmask 1041408
      %v493 = vrot.slane %v309, 6
      %v494 = vrot.slane %v310, 6
      %v495 = vsel %vm492, %v493, %v494
      %v496 = vrot.slane %v311, 6
      %v497 = vsel %vm492, %v494, %v496
      %v498 = vrot.slane %v312, 6
      %v499 = vsel %vm492, %v496, %v498
      %v500 = vrot.slane %v313, 6
      %v501 = vsel %vm492, %v498, %v500
      %v502 = vrot.slane %v314, 6
      %v503 = vsel %vm492, %v500, %v502
      %504 = vrot.lane.b32.xlu0 %v495, 64
      %v505 = vpop.permute.xlu0 %504
      %506 = vrot.lane.b32.xlu0 %v497, 64
      %v507 = vpop.permute.xlu0 %506
      %508 = vrot.lane.b32.xlu0 %v499, 64
      %v509 = vpop.permute.xlu0 %508
      %510 = vrot.lane.b32.xlu0 %v501, 64
      %v511 = vpop.permute.xlu0 %510
      %512 = vrot.lane.b32.xlu0 %v503, 64
      %v513 = vpop.permute.xlu0 %512
      %vm519 = vcmask 64512
      %v520 = vsel %vm519, %v307, %v334
      %v521 = vsel %vm519, %v308, %v336
      %v522 = vsel %vm519, %v309, %v338
      %v523 = vsel %vm519, %v310, %v340
      %v524 = vsel %vm519, %v311, %v342
      %vm525 = vcmask 130048
      %v526 = vsel %vm525, %v520, %v361
      %v527 = vsel %vm525, %v521, %v363
      %v528 = vsel %vm525, %v522, %v365
      %v529 = vsel %vm525, %v523, %v367
      %v530 = vsel %vm525, %v524, %v369
      %vm531 = vcmask 195584
      %v532 = vsel %vm531, %v526, %v379
      %v533 = vsel %vm531, %v527, %v381
      %v534 = vsel %vm531, %v528, %v383
      %v535 = vsel %vm531, %v529, %v385
      %v536 = vsel %vm531, %v530, %v387
      %vm537 = vcmask 261120
      %v538 = vsel %vm537, %v532, %v406
      %v539 = vsel %vm537, %v533, %v408
      %v540 = vsel %vm537, %v534, %v410
      %v541 = vsel %vm537, %v535, %v412
      %v542 = vsel %vm537, %v536, %v414
      %vm543 = vcmask 326656
      %v544 = vsel %vm543, %v538, %v433
      %v545 = vsel %vm543, %v539, %v435
      %v546 = vsel %vm543, %v540, %v437
      %v547 = vsel %vm543, %v541, %v439
      %v548 = vsel %vm543, %v542, %v441
      %vm549 = vcmask 392192
      %v550 = vsel %vm549, %v544, %v451
      %v551 = vsel %vm549, %v545, %v453
      %v552 = vsel %vm549, %v546, %v455
      %v553 = vsel %vm549, %v547, %v457
      %v554 = vsel %vm549, %v548, %v459
      %vm555 = vcmask 457728
      %v556 = vsel %vm555, %v550, %v478
      %v557 = vsel %vm555, %v551, %v480
      %v558 = vsel %vm555, %v552, %v482
      %v559 = vsel %vm555, %v553, %v484
      %v560 = vsel %vm555, %v554, %v486
      %vm561 = vcmask 523264
      %v562 = vsel %vm561, %v556, %v505
      %v563 = vsel %vm561, %v557, %v507
      %v564 = vsel %vm561, %v558, %v509
      %v565 = vsel %vm561, %v559, %v511
      %v566 = vsel %vm561, %v560, %v513
      %v567 = vld [vmem:[%s1] sm:$0xff]
      %v568 = vld [vmem:[%s1 + $0x8] sm:$0xff]
      %v569 = vld [vmem:[%s1 + $0x10] sm:$0xff]
      %v570 = vld [vmem:[%s1 + $0x18] sm:$0xff]
      %v571 = vld [vmem:[%s1 + $0x20] sm:$0xff]
      %v572 = vld [vmem:[%s1 + $0x28] sm:$0xff]
      %v573 = vld [vmem:[%s1 + $0x30] sm:$0xff]
      %v574 = vld [vmem:[%s1 + $0x38] sm:$0xff]
      %v575 = vld [vmem:[%s1 + $0x40] sm:$0xff]
      %v576 = vld [vmem:[%s2] sm:$0x1]
      %v578 = vlaneseq
      %v579 = vshrl.u32 %v578, 7
      %v580 = vsub.s32 0, %v579
      %v581 = vrot.slane %v576, %v580
      %vm583 = vcmask 588800
      %v585 = vsel %vm583, %v562, 0
      %v588 = vsel %vm583, %v563, 0
      %v591 = vsel %vm583, %v564, 0
      %v594 = vsel %vm583, %v565, 0
      %v597 = vsel %vm583, %v566, 0
      %599 = vmatprep.subr.mxu0 0.0
      %600 = vmatpush1.msra.mxu0 0.0
      %601 = vmatprep.subr.mxu0 0.0
      %602 = vmatpush1.msra.mxu0 0.0
      %603 = vmatprep.subr.mxu0 0.0
      %604 = vmatpush1.msra.mxu0 0.0
      %605 = vmatprep.subr.mxu0 0.0
      %606 = vmatpush1.msra.mxu0 0.0
      %607 = vmatprep.subr.mxu0 0.0
      %608 = vmatpush1.msra.mxu0 0.0
      %609 = vmatprep.subr.mxu0 0.0
      %610 = vmatpush1.msra.mxu0 0.0
      %611 = vmatprep.subr.mxu0 0.0
      %612 = vmatpush1.msra.mxu0 0.0
      %613 = vmatprep.subr.mxu0 0.0
      %614 = vmatpush1.msra.mxu0 %v575
      %615 = vmatprep.subr.mxu0 0.0
      %616 = vmatpush1.msra.mxu0 %v574
      %617 = vmatprep.subr.mxu0 0.0
      %618 = vmatpush1.msra.mxu0 %v573
      %619 = vmatprep.subr.mxu0 0.0
      %620 = vmatpush1.msra.mxu0 %v572
      %621 = vmatprep.subr.mxu0 0.0
      %622 = vmatpush1.msra.mxu0 %v571
      %623 = vmatprep.subr.mxu0 0.0
      %624 = vmatpush1.msra.mxu0 %v570
      %625 = vmatprep.subr.mxu0 0.0
      %626 = vmatpush1.msra.mxu0 %v569
      %627 = vmatprep.subr.mxu0 0.0
      %628 = vmatpush1.msra.mxu0 %v568
      %629 = vmatprep.subr.mxu0 0.0
      %630 = vmatpush1.msra.mxu0 %v567
      %631 = vmatprep.subr.mxu0 0.0
      %632 = vmatpush2.msra.mxu0 0.0
      %633 = vmatprep.subr.mxu0 0.0
      %634 = vmatpush2.msra.mxu0 0.0
      %635 = vmatprep.subr.mxu0 0.0
      %636 = vmatpush2.msra.mxu0 0.0
      %637 = vmatprep.subr.mxu0 0.0
      %638 = vmatpush2.msra.mxu0 0.0
      %639 = vmatprep.subr.mxu0 0.0
      %640 = vmatpush2.msra.mxu0 0.0
      %641 = vmatprep.subr.mxu0 0.0
      %642 = vmatpush2.msra.mxu0 0.0
      %643 = vmatprep.subr.mxu0 0.0
      %644 = vmatpush2.msra.mxu0 0.0
      %645 = vmatprep.subr.mxu0 0.0
      %646 = vmatpush2.msra.mxu0 0.0
      %647 = vmatprep.subr.mxu0 0.0
      %648 = vmatpush2.msra.mxu0 0.0
      %649 = vmatprep.subr.mxu0 0.0
      %650 = vmatpush2.msra.mxu0 0.0
      %651 = vmatprep.subr.mxu0 0.0
      %652 = vmatpush2.msra.mxu0 0.0
      %653 = vmatprep.subr.mxu0 0.0
      %654 = vmatpush2.msra.mxu0 0.0
      %655 = vmatprep.subr.mxu0 0.0
      %656 = vmatpush2.msra.mxu0 0.0
      %657 = vmatprep.subr.mxu0 0.0
      %658 = vmatpush2.msra.mxu0 0.0
      %659 = vmatprep.subr.mxu0 0.0
      %660 = vmatpush2.msra.mxu0 0.0
      %661 = vmatprep.subr.mxu0 0.0
      %662 = vmatpush2.msra.mxu0 0.0
      %663 = vmatprep.mubr.f32.mxu0 0.0
      %664 = vmatmul.mubr.f32.gmra.mxu0 %v585
      %v665 = vpop.f32.mrf.mxu0
      %v666 = vadd.f32 %v581, %v665
      %v667 = vpop.f32.mrf.mxu0
      %668 = vmatprep.mubr.f32.mxu0 0.0
      %669 = vmatmul.mubr.f32.gmra.mxu0 %v588
      %v670 = vpop.f32.mrf.mxu0
      %v671 = vadd.f32 %v581, %v670
      %v672 = vpop.f32.mrf.mxu0
      %673 = vmatprep.mubr.f32.mxu0 0.0
      %674 = vmatmul.mubr.f32.gmra.mxu0 %v591
      %v675 = vpop.f32.mrf.mxu0
      %v676 = vadd.f32 %v581, %v675
      %v677 = vpop.f32.mrf.mxu0
      %678 = vmatprep.mubr.f32.mxu0 0.0
      %679 = vmatmul.mubr.f32.gmra.mxu0 %v594
      %v680 = vpop.f32.mrf.mxu0
      %v681 = vadd.f32 %v581, %v680
      %v682 = vpop.f32.mrf.mxu0
      %683 = vmatprep.mubr.f32.mxu0 0.0
      %684 = vmatmul.mubr.f32.gmra.mxu0 %v597
      %v685 = vpop.f32.mrf.mxu0
      %v686 = vadd.f32 %v581, %v685
      %v687 = vpop.f32.mrf.mxu0
      %688 = vdwg.mxu0
      %vm689 = vcmp.gt.f32.partialorder %v666, 0.0
      %vm690 = vcmp.gt.f32.partialorder %v671, 0.0
      %vm691 = vcmp.gt.f32.partialorder %v676, 0.0
      %vm692 = vcmp.gt.f32.partialorder %v681, 0.0
      %vm693 = vcmp.gt.f32.partialorder %v686, 0.0
      %v694 = vld [vmem:[%s3] sm:$0x1]
      %v696 = vlaneseq
      %v697 = vshrl.u32 %v696, 7
      %v698 = vsub.s32 0, %v697
      %v699 = vrot.slane %v694, %v698
      %v701 = vmul.f32 %v699, %v666
      %v702 = vmul.f32 %v699, %v671
      %v703 = vmul.f32 %v699, %v676
      %v704 = vmul.f32 %v699, %v681
      %v705 = vmul.f32 %v699, %v686
      %v706 = vsel %vm689, %v666, %v701
      %v707 = vsel %vm690, %v671, %v702
      %v708 = vsel %vm691, %v676, %v703
      %v709 = vsel %vm692, %v681, %v704
      %v710 = vsel %vm693, %v686, %v705
      %v711 = vld [vmem:[%s4] sm:$0xff]
      %v712 = vld [vmem:[%s4 + $0x8] sm:$0xff]
      %v713 = vld [vmem:[%s4 + $0x10] sm:$0xff]
      %v714 = vld [vmem:[%s4 + $0x18] sm:$0xff]
      %v715 = vld [vmem:[%s4 + $0x20] sm:$0xff]
      %717 = vset.pattern.permute.xlu0 0
      %718 = vperm.xlu0 %717, %v711
      %v719 = vpop.permute.xlu0 %718
      %722 = vset.pattern.permute.xlu0 0
      %723 = vperm.xlu0 %722, %v712
      %v724 = vpop.permute.xlu0 %723
      %727 = vset.pattern.permute.xlu0 0
      %728 = vperm.xlu0 %727, %v713
      %v729 = vpop.permute.xlu0 %728
      %732 = vset.pattern.permute.xlu0 0
      %733 = vperm.xlu0 %732, %v714
      %v734 = vpop.permute.xlu0 %733
      %737 = vset.pattern.permute.xlu0 0
      %738 = vperm.xlu0 %737, %v715
      %v739 = vpop.permute.xlu0 %738
      %v741 = vmul.f32 %v706, %v719
      %v742 = vmul.f32 %v707, %v724
      %v743 = vmul.f32 %v708, %v729
      %v744 = vmul.f32 %v709, %v734
      %v745 = vmul.f32 %v710, %v739
      %v746 = vadd.f32 %v741, %v742
      %v747 = vadd.f32 %v746, %v743
      %v748 = vadd.f32 %v747, %v744
      %v749 = vadd.f32 %v748, %v745
      %v750 = vrot.slane %v749, 4
      %v751 = vadd.f32 %v749, %v750
      %v752 = vrot.slane %v751, 2
      %v753 = vadd.f32 %v751, %v752
      %v754 = vrot.slane %v753, 1
      %v755 = vadd.f32 %v753, %v754
      %756 = vst [vmem:[%s306] sm:$0x1] %v755
      %757 = vst [vmem:[%s299] sm:$0xff] %v706
      %758 = vst [vmem:[%s299 + $0x8] sm:$0xff] %v707
      %759 = vst [vmem:[%s299 + $0x10] sm:$0xff] %v708
      %760 = vst [vmem:[%s299 + $0x18] sm:$0xff] %v709
      %761 = vst [vmem:[%s299 + $0x20] sm:$0xff] %v710
      %p762 = scmp.lt.s32.totalorder %s22, 1
      %s763 = scalar_select %p762, %s22, 1
      %p764 = scmp.lt.s32.totalorder %s23, 1
      %s765 = scalar_select %p764, %s23, 1
      %s766 = smul.addr %s765, 5
      %s767 = smul.addr %s763, 10
      %s768 = sadd.s32 %s766, %s767
      %s769 = smul.addr %s768, 8
      %s770 = scalar_lea.vmem %s5, %s769
      %p771 = scmp.lt.s32.totalorder %s22, 1
      %s772 = scalar_select %p771, %s22, 1
      %p773 = scmp.lt.s32.totalorder %s23, 1
      %s774 = scalar_select %p773, %s23, 1
      %s775 = smul.addr %s772, 2
      %s776 = sadd.s32 %s774, %s775
      %s777 = scalar_lea.vmem %s6, %s776
      // Predicated region
      $region41: #{deconv_apply.2} parent=39 // pred_check
        %p778 = pneg %p162
      $region42: #{deconv_apply.2} parent=39 // pred_check_branch
        %780 = sbr.rel (%p778) target = $region44
      $region43: #{deconv_apply.2} parent=39 // pred_region
        _
      $region44: #{deconv_apply.2} parent=39 // pred_fallthru
        _
      // Predicated region
      $region45: #{deconv_apply.2} parent=39 // pred_check
        %p781 = pneg %p190
      $region46: #{deconv_apply.2} parent=39 // pred_check_branch
        %783 = sbr.rel (%p781) target = $region48
      $region47: #{deconv_apply.2} parent=39 // pred_region
        _
      $region48: #{deconv_apply.2} parent=39 // pred_fallthru
        _
    $region40: #{deconv_apply.2} parent=5 // pred_fallthru
      _
    %p784 = scmp.le.s32.totalorder 2, %s13
    // Predicated region
    $region49: #{deconv_apply.2} parent=5 // pred_check
      %p785 = pneg %p784
    $region50: #{deconv_apply.2} parent=5 // pred_check_branch
      %787 = sbr.rel (%p785) target = $region52
    $region51: #{deconv_apply.2} parent=5 // pred_region
      %s788 = ssub.s32 %s13, 2
      // Predicated region
      $region53: #{deconv_apply.2} parent=51 // pred_check
        %p789 = pneg %p168
      $region54: #{deconv_apply.2} parent=51 // pred_check_branch
        %791 = sbr.rel (%p789) target = $region56
      $region55: #{deconv_apply.2} parent=51 // pred_region
        %p792 = scmp.lt.s32.totalorder %s24, 1
        %s793 = scalar_select %p792, %s24, 1
        %p794 = scmp.lt.s32.totalorder %s25, 1
        %s795 = scalar_select %p794, %s25, 1
        %s796 = smul.addr %s795, 5
        %s797 = smul.addr %s793, 10
        %s798 = sadd.s32 %s796, %s797
        %s799 = smul.addr %s798, 8
        %s800 = scalar_lea.vmem %s5, %s799
      $region56: #{deconv_apply.2} parent=51 // pred_fallthru
        _
      // Predicated region
      $region57: #{deconv_apply.2} parent=51 // pred_check
        %p801 = pneg %p196
      $region58: #{deconv_apply.2} parent=51 // pred_check_branch
        %803 = sbr.rel (%p801) target = $region60
      $region59: #{deconv_apply.2} parent=51 // pred_region
        %p804 = scmp.lt.s32.totalorder %s24, 1
        %s805 = scalar_select %p804, %s24, 1
        %p806 = scmp.lt.s32.totalorder %s25, 1
        %s807 = scalar_select %p806, %s25, 1
        %s808 = smul.addr %s805, 2
        %s809 = sadd.s32 %s807, %s808
        %s810 = scalar_lea.vmem %s6, %s809
      $region60: #{deconv_apply.2} parent=51 // pred_fallthru
        _
    $region52: #{deconv_apply.2} parent=5 // pred_fallthru
      _
  $region6: #{deconv_apply.2} parent=0 // loop_footer
    %s17 = sadd.s32 1, %s13
  $region7: #{deconv_apply.2} parent=0 // loop_footer_branch
    %12 = sbr.rel target = $region3
  $region8: #{deconv_apply.2} parent=0 // loop_exit
    _

</llo_original>
